<compile_context>
chip_gen: v7x
topology: tpu7x:2x2x1
jax: 0.10.0
libtpu: 0.0.40
codegen_flags: <defaults>
</compile_context>

<pallas_src>
import functools

import numpy as np

import jax
import jax.numpy as jnp
from jax.experimental import pallas as pl
from jax.experimental.pallas import tpu as pltpu


# ------------------------- fused DTGL forward kernel -------------------------
def make_dtgl_kernel(B, T, num_gcn, max_skip, H):
    TB = B * T

    def _sigmoid(z):
        return 1.0 / (1.0 + jnp.exp(-z))

    def kernel(*refs):
        it = iter(refs)
        x_ref = next(it)                                      # (B*T, F)
        adjx_ref = next(it)                                   # (B*T, B*T) block-diag adjacency
        wcol_ref = next(it)                                   # (B*T, 1) blend weights
        gcn_refs = [(next(it), next(it)) for _ in range(num_gcn)]           # (Din,H), (1,H)
        lstm_refs = [(next(it), next(it), next(it)) for _ in range(max_skip)]  # (H,4H),(H,4H),(1,4H)
        scat_refs = [next(it) for _ in range(max_skip - 1)]   # p>=2: (B*T, n_p) one-hot scatter
        gath_refs = [next(it) for _ in range(max_skip - 1)]   # p>=2: (p, n_p, B*T) one-hot gather
        o_ref = next(it)                                      # (B*T, H)
        f32 = jnp.float32

        # ---- GCN stack: relu(adj_blockdiag @ (x @ W^T + b)), batch flattened into rows ----
        adjx = adjx_ref[...]
        cur = x_ref[...]                                      # (B*T, F)
        for wt_ref, b_ref in gcn_refs:
            support = jnp.dot(cur, wt_ref[...], preferred_element_type=f32) + b_ref[...]
            cur = jnp.maximum(jnp.dot(adjx, support, preferred_element_type=f32), 0.0)
        # cur: (B*T, H), stays resident in VMEM/vregs for all skips below.

        # Rows that keep x (for each skip) accumulate here with the precomputed weight column.
        acc = cur * wcol_ref[...]                             # (B*T, H)

        # ---- multi-skip LSTM smoothing (windows batched as rows), lane-fused gates ----
        for pi in range(max_skip):
            p = pi + 1
            nwin = T // p                                     # disjoint length-p windows
            n = nwin * B                                      # windows-as-batch rows
            wih_ref, whh_ref, b_ref = lstm_refs[pi]

            # Hoisted input projection: ONE matmul over ALL rows, all 4 gates in the lanes.
            gx = jnp.dot(cur, wih_ref[...], preferred_element_type=f32) + b_ref[...]  # (B*T, 4H)
            whh = whh_ref[...]                                # (H, 4H)

            h = None
            c = None
            for s in range(p):                                # short static unrolled recurrence
                if p == 1:
                    xg = gx                                   # rows already in (b, w) order
                else:
                    # one-hot gather matmul instead of per-row slices/concats
                    xg = jnp.dot(gath_refs[pi - 1][s], gx, preferred_element_type=f32)  # (n, 4H)
                if s == 0:
                    z = xg                                    # zero initial hidden state
                else:
                    z = xg + jnp.dot(h, whh, preferred_element_type=f32)
                i_g = _sigmoid(z[:, 0:H])
                f_g = _sigmoid(z[:, H:2 * H])
                g_g = jnp.tanh(z[:, 2 * H:3 * H])
                o_g = _sigmoid(z[:, 3 * H:4 * H])
                c = i_g * g_g if s == 0 else f_g * c + i_g * g_g
                h = o_g * jnp.tanh(c)

            if p == 1:
                acc = acc + h                                 # scatter for p=1 is the identity
            else:
                acc = acc + jnp.dot(scat_refs[pi - 1][...], h, preferred_element_type=f32)

        # ---- single full-width store of the mean over skips ----
        o_ref[...] = acc * (1.0 / float(max_skip))

    return kernel


# ---------------------------- parameter preparation ---------------------------
def prepare_params(params, hidden_dim):
    """Pre-transpose all weights ONCE (outside the jitted forward); gates stay lane-fused."""
    H = hidden_dim
    flat = []
    for w, b in params["gcn"]:
        flat.append(jnp.asarray(w, jnp.float32).T)                   # (Din, H)
        flat.append(jnp.asarray(b, jnp.float32).reshape(1, H))       # (1, H)
    for wih, whh, bih, bhh in params["lstm"]:
        flat.append(jnp.asarray(wih, jnp.float32).T)                 # (H, 4H) gates i|f|g|o on lanes
        flat.append(jnp.asarray(whh, jnp.float32).T)                 # (H, 4H)
        flat.append((jnp.asarray(bih, jnp.float32)
                     + jnp.asarray(bhh, jnp.float32)).reshape(1, 4 * H))  # (1, 4H)
    return tuple(flat)


# -------------------- trace-time constant gather / scatter / weights --------------------
def _blend_constants(B, T, max_skip):
    """One-hot gather (per skip>=2, per step) / scatter (per skip>=2) matrices + weight column."""
    TB = B * T
    wcol = np.full((TB, 1), float(max_skip), np.float32)
    scatters, gathers = [], []
    for p in range(1, max_skip + 1):
        nwin = T // p
        n = nwin * B
        S = np.zeros((TB, n), np.float32)
        G = np.zeros((p, n, TB), np.float32)
        for b in range(B):
            for w in range(nwin):
                r_end = b * T + (w + 1) * p - 1               # window-end row gets LSTM output
                wcol[r_end, 0] -= 1.0
                S[r_end, b * nwin + w] = 1.0
                for s in range(p):
                    G[s, b * nwin + w, b * T + w * p + s] = 1.0
        if p >= 2:                                            # p=1 gather/scatter are identities
            scatters.append(S)
            gathers.append(G)
    return wcol, scatters, gathers


# --------------------------------- forward -----------------------------------
def dtgl_forward(x, adj, flat_params, *, num_gcn, max_skip, hidden_dim):
    B, T, F = x.shape
    H = hidden_dim
    TB = B * T

    # Block-diagonal adjacency built OUTSIDE the kernel (one ~1 KB input, pipelines for free).
    adjx = jnp.kron(jnp.eye(B, dtype=jnp.float32), adj.astype(jnp.float32))   # (B*T, B*T)
    wcol, scatters, gathers = _blend_constants(B, T, max_skip)

    args = (x.reshape(TB, F),                                  # free reshape, rows b-major
            adjx,
            jnp.asarray(wcol),
            *flat_params,
            *[jnp.asarray(s) for s in scatters],
            *[jnp.asarray(g) for g in gathers])

    kernel = make_dtgl_kernel(B, T, num_gcn, max_skip, H)
    out2d = pl.pallas_call(
        kernel,
        out_shape=jax.ShapeDtypeStruct((TB, H), jnp.float32),
        in_specs=[pl.BlockSpec(memory_space=pltpu.MemorySpace.VMEM) for _ in args],
        out_specs=pl.BlockSpec(memory_space=pltpu.MemorySpace.VMEM),
    )(*args)
    return out2d.reshape(B, T, H)


# ---------------------------- pure-JAX reference -----------------------------
def dtgl_ref(x, adj, params, max_skip):
    for (w, b) in params["gcn"]:
        support = x @ w.T + b
        x = jax.nn.relu(jnp.matmul(adj, support))
    B, T, H = x.shape
    outputs = []
    for p in range(1, max_skip + 1):
        wih, whh, bih, bhh = params["lstm"][p - 1]
        new_h = x
        for t in range(p - 1, T, p):
            window = x[:, t - p + 1:t + 1, :]
            h = jnp.zeros((B, H), jnp.float32)
            c = jnp.zeros((B, H), jnp.float32)
            for s in range(p):
                g = window[:, s] @ wih.T + bih + h @ whh.T + bhh
                i_g = jax.nn.sigmoid(g[:, 0:H])
                f_g = jax.nn.sigmoid(g[:, H:2 * H])
                g_g = jnp.tanh(g[:, 2 * H:3 * H])
                o_g = jax.nn.sigmoid(g[:, 3 * H:4 * H])
                c = f_g * c + i_g * g_g
                h = o_g * jnp.tanh(c)
            new_h = new_h.at[:, t, :].set(h)
        outputs.append(new_h)
    return jnp.mean(jnp.stack(outputs, axis=-1), axis=-1)


# --------------------------------- main ---------------------------------------
if __name__ == "__main__":
    # module config
    input_dim, hidden_dim = 16, 32
    num_gcn_layers, num_lstm_layers, max_skip = 2, 1, 3  # num_lstm_layers unused in fwd
    B, T = 2, 8

    key = jax.random.PRNGKey(0)
    keys = jax.random.split(key, 32)
    ki = iter(range(32))

    # deterministic synthetic parameters (shapes follow the PyTorch __init__)
    gcn_params = []
    for li in range(num_gcn_layers):
        din = input_dim if li == 0 else hidden_dim
        w = 0.1 * jax.random.normal(keys[next(ki)], (hidden_dim, din), jnp.float32)
        b = 0.1 * jax.random.normal(keys[next(ki)], (hidden_dim,), jnp.float32)
        gcn_params.append((w, b))

    lstm_params = []
    for _ in range(max_skip):
        wih = 0.1 * jax.random.normal(keys[next(ki)], (4 * hidden_dim, hidden_dim), jnp.float32)
        whh = 0.1 * jax.random.normal(keys[next(ki)], (4 * hidden_dim, hidden_dim), jnp.float32)
        bih = 0.1 * jax.random.normal(keys[next(ki)], (4 * hidden_dim,), jnp.float32)
        bhh = 0.1 * jax.random.normal(keys[next(ki)], (4 * hidden_dim,), jnp.float32)
        lstm_params.append((wih, whh, bih, bhh))

    params = {"gcn": gcn_params, "lstm": lstm_params}
    flat_params = prepare_params(params, hidden_dim)     # one-time weight prep

    # inputs
    x = jax.random.normal(keys[next(ki)], (B, T, input_dim), jnp.float32)
    adj = jax.random.normal(keys[next(ki)], (T, T), jnp.float32) / float(T)

    fwd = jax.jit(functools.partial(
        dtgl_forward, num_gcn=num_gcn_layers, max_skip=max_skip, hidden_dim=hidden_dim))
    out = jax.block_until_ready(fwd(x, adj, flat_params))

    ref = dtgl_ref(x, adj, params, max_skip)
    assert out.shape == (B, T, hidden_dim)
    assert jnp.allclose(out, ref, rtol=1e-3, atol=1e-3), float(jnp.max(jnp.abs(out - ref)))

    print("KERNEL_OK")
</pallas_src>

<mosaic_0001>
module attributes {stable_mosaic.version = 11 : i64} {
  func.func @kernel(%arg0: memref<16x16xf32, #tpu.memory_space<vmem>>, %arg1: memref<16x16xf32, #tpu.memory_space<vmem>>, %arg2: memref<16x1xf32, #tpu.memory_space<vmem>>, %arg3: memref<16x32xf32, #tpu.memory_space<vmem>>, %arg4: memref<1x32xf32, #tpu.memory_space<vmem>>, %arg5: memref<32x32xf32, #tpu.memory_space<vmem>>, %arg6: memref<1x32xf32, #tpu.memory_space<vmem>>, %arg7: memref<32x128xf32, #tpu.memory_space<vmem>>, %arg8: memref<32x128xf32, #tpu.memory_space<vmem>>, %arg9: memref<1x128xf32, #tpu.memory_space<vmem>>, %arg10: memref<32x128xf32, #tpu.memory_space<vmem>>, %arg11: memref<32x128xf32, #tpu.memory_space<vmem>>, %arg12: memref<1x128xf32, #tpu.memory_space<vmem>>, %arg13: memref<32x128xf32, #tpu.memory_space<vmem>>, %arg14: memref<32x128xf32, #tpu.memory_space<vmem>>, %arg15: memref<1x128xf32, #tpu.memory_space<vmem>>, %arg16: memref<16x8xf32, #tpu.memory_space<vmem>>, %arg17: memref<16x4xf32, #tpu.memory_space<vmem>>, %arg18: memref<2x8x16xf32, #tpu.memory_space<vmem>>, %arg19: memref<3x4x16xf32, #tpu.memory_space<vmem>>, %arg20: memref<16x32xf32, #tpu.memory_space<vmem>>) attributes {dimension_semantics = [], scalar_prefetch = 0 : i64, scratch_operands = 0 : i64, tpu.core_type = #tpu.core_type<tc>} {
    %c0 = arith.constant 0 : index
    %c0_0 = arith.constant 0 : index
    %0 = vector.load %arg1[%c0, %c0_0] : memref<16x16xf32, #tpu.memory_space<vmem>>, vector<16x16xf32>
    %c0_1 = arith.constant 0 : index
    %c0_2 = arith.constant 0 : index
    %1 = vector.load %arg0[%c0_1, %c0_2] : memref<16x16xf32, #tpu.memory_space<vmem>>, vector<16x16xf32>
    %c0_3 = arith.constant 0 : index
    %c0_4 = arith.constant 0 : index
    %2 = vector.load %arg3[%c0_3, %c0_4] : memref<16x32xf32, #tpu.memory_space<vmem>>, vector<16x32xf32>
    %cst = arith.constant dense<0.000000e+00> : vector<16x32xf32>
    %3 = tpu.matmul %1, %2, %cst {dimension_numbers = #tpu.dot_dimension_numbers<[1], [0], [0], [1], [0, 0, 1, 1], [], []>} : vector<16x16xf32>, vector<16x32xf32>, vector<16x32xf32> -> vector<16x32xf32>
    %c0_5 = arith.constant 0 : index
    %c0_6 = arith.constant 0 : index
    %4 = vector.load %arg4[%c0_5, %c0_6] : memref<1x32xf32, #tpu.memory_space<vmem>>, vector<1x32xf32>
    %5 = vector.broadcast %4 : vector<1x32xf32> to vector<16x32xf32>
    %6 = arith.addf %3, %5 : vector<16x32xf32>
    %cst_7 = arith.constant dense<0.000000e+00> : vector<16x32xf32>
    %7 = tpu.matmul %0, %6, %cst_7 {dimension_numbers = #tpu.dot_dimension_numbers<[1], [0], [0], [1], [0, 0, 1, 1], [], []>} : vector<16x16xf32>, vector<16x32xf32>, vector<16x32xf32> -> vector<16x32xf32>
    %cst_8 = arith.constant 0.000000e+00 : f32
    %8 = vector.broadcast %cst_8 : f32 to vector<16x32xf32>
    %9 = arith.maximumf %7, %8 : vector<16x32xf32>
    %c0_9 = arith.constant 0 : index
    %c0_10 = arith.constant 0 : index
    %10 = vector.load %arg5[%c0_9, %c0_10] : memref<32x32xf32, #tpu.memory_space<vmem>>, vector<32x32xf32>
    %cst_11 = arith.constant dense<0.000000e+00> : vector<16x32xf32>
    %11 = tpu.matmul %9, %10, %cst_11 {dimension_numbers = #tpu.dot_dimension_numbers<[1], [0], [0], [1], [0, 0, 1, 1], [], []>} : vector<16x32xf32>, vector<32x32xf32>, vector<16x32xf32> -> vector<16x32xf32>
    %c0_12 = arith.constant 0 : index
    %c0_13 = arith.constant 0 : index
    %12 = vector.load %arg6[%c0_12, %c0_13] : memref<1x32xf32, #tpu.memory_space<vmem>>, vector<1x32xf32>
    %13 = vector.broadcast %12 : vector<1x32xf32> to vector<16x32xf32>
    %14 = arith.addf %11, %13 : vector<16x32xf32>
    %cst_14 = arith.constant dense<0.000000e+00> : vector<16x32xf32>
    %15 = tpu.matmul %0, %14, %cst_14 {dimension_numbers = #tpu.dot_dimension_numbers<[1], [0], [0], [1], [0, 0, 1, 1], [], []>} : vector<16x16xf32>, vector<16x32xf32>, vector<16x32xf32> -> vector<16x32xf32>
    %cst_15 = arith.constant 0.000000e+00 : f32
    %16 = vector.broadcast %cst_15 : f32 to vector<16x32xf32>
    %17 = arith.maximumf %15, %16 : vector<16x32xf32>
    %c0_16 = arith.constant 0 : index
    %c0_17 = arith.constant 0 : index
    %18 = vector.load %arg2[%c0_16, %c0_17] : memref<16x1xf32, #tpu.memory_space<vmem>>, vector<16x1xf32>
    %19 = vector.broadcast %18 : vector<16x1xf32> to vector<16x32xf32>
    %20 = arith.mulf %17, %19 : vector<16x32xf32>
    %c0_18 = arith.constant 0 : index
    %c0_19 = arith.constant 0 : index
    %21 = vector.load %arg7[%c0_18, %c0_19] : memref<32x128xf32, #tpu.memory_space<vmem>>, vector<32x128xf32>
    %cst_20 = arith.constant dense<0.000000e+00> : vector<16x128xf32>
    %22 = tpu.matmul %17, %21, %cst_20 {dimension_numbers = #tpu.dot_dimension_numbers<[1], [0], [0], [1], [0, 0, 1, 1], [], []>} : vector<16x32xf32>, vector<32x128xf32>, vector<16x128xf32> -> vector<16x128xf32>
    %c0_21 = arith.constant 0 : index
    %c0_22 = arith.constant 0 : index
    %23 = vector.load %arg9[%c0_21, %c0_22] : memref<1x128xf32, #tpu.memory_space<vmem>>, vector<1x128xf32>
    %24 = vector.broadcast %23 : vector<1x128xf32> to vector<16x128xf32>
    %25 = arith.addf %22, %24 : vector<16x128xf32>
    %26 = vector.extract_strided_slice %25 {offsets = [0, 0], sizes = [16, 32], strides = [1, 1]} : vector<16x128xf32> to vector<16x32xf32>
    %cst_23 = arith.constant 0.000000e+00 : f32
    %27 = vector.broadcast %cst_23 : f32 to vector<16x32xf32>
    %28 = arith.subf %27, %26 : vector<16x32xf32>
    %29 = math.exp %28 : vector<16x32xf32>
    %cst_24 = arith.constant 1.000000e+00 : f32
    %30 = vector.broadcast %cst_24 : f32 to vector<16x32xf32>
    %31 = arith.addf %30, %29 : vector<16x32xf32>
    %cst_25 = arith.constant 1.000000e+00 : f32
    %32 = vector.broadcast %cst_25 : f32 to vector<16x32xf32>
    %33 = arith.divf %32, %31 : vector<16x32xf32>
    %34 = vector.extract_strided_slice %25 {offsets = [0, 64], sizes = [16, 32], strides = [1, 1]} : vector<16x128xf32> to vector<16x32xf32>
    %35 = math.tanh %34 : vector<16x32xf32>
    %36 = vector.extract_strided_slice %25 {offsets = [0, 96], sizes = [16, 32], strides = [1, 1]} : vector<16x128xf32> to vector<16x32xf32>
    %cst_26 = arith.constant 0.000000e+00 : f32
    %37 = vector.broadcast %cst_26 : f32 to vector<16x32xf32>
    %38 = arith.subf %37, %36 : vector<16x32xf32>
    %39 = math.exp %38 : vector<16x32xf32>
    %cst_27 = arith.constant 1.000000e+00 : f32
    %40 = vector.broadcast %cst_27 : f32 to vector<16x32xf32>
    %41 = arith.addf %40, %39 : vector<16x32xf32>
    %cst_28 = arith.constant 1.000000e+00 : f32
    %42 = vector.broadcast %cst_28 : f32 to vector<16x32xf32>
    %43 = arith.divf %42, %41 : vector<16x32xf32>
    %44 = arith.mulf %33, %35 : vector<16x32xf32>
    %45 = math.tanh %44 : vector<16x32xf32>
    %46 = arith.mulf %43, %45 : vector<16x32xf32>
    %47 = arith.addf %20, %46 : vector<16x32xf32>
    %c0_29 = arith.constant 0 : index
    %c0_30 = arith.constant 0 : index
    %48 = vector.load %arg10[%c0_29, %c0_30] : memref<32x128xf32, #tpu.memory_space<vmem>>, vector<32x128xf32>
    %cst_31 = arith.constant dense<0.000000e+00> : vector<16x128xf32>
    %49 = tpu.matmul %17, %48, %cst_31 {dimension_numbers = #tpu.dot_dimension_numbers<[1], [0], [0], [1], [0, 0, 1, 1], [], []>} : vector<16x32xf32>, vector<32x128xf32>, vector<16x128xf32> -> vector<16x128xf32>
    %c0_32 = arith.constant 0 : index
    %c0_33 = arith.constant 0 : index
    %50 = vector.load %arg12[%c0_32, %c0_33] : memref<1x128xf32, #tpu.memory_space<vmem>>, vector<1x128xf32>
    %51 = vector.broadcast %50 : vector<1x128xf32> to vector<16x128xf32>
    %52 = arith.addf %49, %51 : vector<16x128xf32>
    %c0_34 = arith.constant 0 : index
    %c0_35 = arith.constant 0 : index
    %53 = vector.load %arg11[%c0_34, %c0_35] : memref<32x128xf32, #tpu.memory_space<vmem>>, vector<32x128xf32>
    %c0_36 = arith.constant 0 : index
    %c0_37 = arith.constant 0 : index
    %c0_38 = arith.constant 0 : index
    %54 = vector.load %arg18[%c0_36, %c0_37, %c0_38] : memref<2x8x16xf32, #tpu.memory_space<vmem>>, vector<1x8x16xf32>
    %55 = vector.shape_cast %54 : vector<1x8x16xf32> to vector<8x16xf32>
    %cst_39 = arith.constant dense<0.000000e+00> : vector<8x128xf32>
    %56 = tpu.matmul %55, %52, %cst_39 {dimension_numbers = #tpu.dot_dimension_numbers<[1], [0], [0], [1], [0, 0, 1, 1], [], []>} : vector<8x16xf32>, vector<16x128xf32>, vector<8x128xf32> -> vector<8x128xf32>
    %57 = vector.extract_strided_slice %56 {offsets = [0, 0], sizes = [8, 32], strides = [1, 1]} : vector<8x128xf32> to vector<8x32xf32>
    %cst_40 = arith.constant 0.000000e+00 : f32
    %58 = vector.broadcast %cst_40 : f32 to vector<8x32xf32>
    %59 = arith.subf %58, %57 : vector<8x32xf32>
    %60 = math.exp %59 : vector<8x32xf32>
    %cst_41 = arith.constant 1.000000e+00 : f32
    %61 = vector.broadcast %cst_41 : f32 to vector<8x32xf32>
    %62 = arith.addf %61, %60 : vector<8x32xf32>
    %cst_42 = arith.constant 1.000000e+00 : f32
    %63 = vector.broadcast %cst_42 : f32 to vector<8x32xf32>
    %64 = arith.divf %63, %62 : vector<8x32xf32>
    %65 = vector.extract_strided_slice %56 {offsets = [0, 64], sizes = [8, 32], strides = [1, 1]} : vector<8x128xf32> to vector<8x32xf32>
    %66 = math.tanh %65 : vector<8x32xf32>
    %67 = vector.extract_strided_slice %56 {offsets = [0, 96], sizes = [8, 32], strides = [1, 1]} : vector<8x128xf32> to vector<8x32xf32>
    %cst_43 = arith.constant 0.000000e+00 : f32
    %68 = vector.broadcast %cst_43 : f32 to vector<8x32xf32>
    %69 = arith.subf %68, %67 : vector<8x32xf32>
    %70 = math.exp %69 : vector<8x32xf32>
    %cst_44 = arith.constant 1.000000e+00 : f32
    %71 = vector.broadcast %cst_44 : f32 to vector<8x32xf32>
    %72 = arith.addf %71, %70 : vector<8x32xf32>
    %cst_45 = arith.constant 1.000000e+00 : f32
    %73 = vector.broadcast %cst_45 : f32 to vector<8x32xf32>
    %74 = arith.divf %73, %72 : vector<8x32xf32>
    %75 = arith.mulf %64, %66 : vector<8x32xf32>
    %76 = math.tanh %75 : vector<8x32xf32>
    %77 = arith.mulf %74, %76 : vector<8x32xf32>
    %c1 = arith.constant 1 : index
    %c0_46 = arith.constant 0 : index
    %c0_47 = arith.constant 0 : index
    %78 = vector.load %arg18[%c1, %c0_46, %c0_47] : memref<2x8x16xf32, #tpu.memory_space<vmem>>, vector<1x8x16xf32>
    %79 = vector.shape_cast %78 : vector<1x8x16xf32> to vector<8x16xf32>
    %cst_48 = arith.constant dense<0.000000e+00> : vector<8x128xf32>
    %80 = tpu.matmul %79, %52, %cst_48 {dimension_numbers = #tpu.dot_dimension_numbers<[1], [0], [0], [1], [0, 0, 1, 1], [], []>} : vector<8x16xf32>, vector<16x128xf32>, vector<8x128xf32> -> vector<8x128xf32>
    %cst_49 = arith.constant dense<0.000000e+00> : vector<8x128xf32>
    %81 = tpu.matmul %77, %53, %cst_49 {dimension_numbers = #tpu.dot_dimension_numbers<[1], [0], [0], [1], [0, 0, 1, 1], [], []>} : vector<8x32xf32>, vector<32x128xf32>, vector<8x128xf32> -> vector<8x128xf32>
    %82 = arith.addf %80, %81 : vector<8x128xf32>
    %83 = vector.extract_strided_slice %82 {offsets = [0, 0], sizes = [8, 32], strides = [1, 1]} : vector<8x128xf32> to vector<8x32xf32>
    %cst_50 = arith.constant 0.000000e+00 : f32
    %84 = vector.broadcast %cst_50 : f32 to vector<8x32xf32>
    %85 = arith.subf %84, %83 : vector<8x32xf32>
    %86 = math.exp %85 : vector<8x32xf32>
    %cst_51 = arith.constant 1.000000e+00 : f32
    %87 = vector.broadcast %cst_51 : f32 to vector<8x32xf32>
    %88 = arith.addf %87, %86 : vector<8x32xf32>
    %cst_52 = arith.constant 1.000000e+00 : f32
    %89 = vector.broadcast %cst_52 : f32 to vector<8x32xf32>
    %90 = arith.divf %89, %88 : vector<8x32xf32>
    %91 = vector.extract_strided_slice %82 {offsets = [0, 32], sizes = [8, 32], strides = [1, 1]} : vector<8x128xf32> to vector<8x32xf32>
    %cst_53 = arith.constant 0.000000e+00 : f32
    %92 = vector.broadcast %cst_53 : f32 to vector<8x32xf32>
    %93 = arith.subf %92, %91 : vector<8x32xf32>
    %94 = math.exp %93 : vector<8x32xf32>
    %cst_54 = arith.constant 1.000000e+00 : f32
    %95 = vector.broadcast %cst_54 : f32 to vector<8x32xf32>
    %96 = arith.addf %95, %94 : vector<8x32xf32>
    %cst_55 = arith.constant 1.000000e+00 : f32
    %97 = vector.broadcast %cst_55 : f32 to vector<8x32xf32>
    %98 = arith.divf %97, %96 : vector<8x32xf32>
    %99 = vector.extract_strided_slice %82 {offsets = [0, 64], sizes = [8, 32], strides = [1, 1]} : vector<8x128xf32> to vector<8x32xf32>
    %100 = math.tanh %99 : vector<8x32xf32>
    %101 = vector.extract_strided_slice %82 {offsets = [0, 96], sizes = [8, 32], strides = [1, 1]} : vector<8x128xf32> to vector<8x32xf32>
    %cst_56 = arith.constant 0.000000e+00 : f32
    %102 = vector.broadcast %cst_56 : f32 to vector<8x32xf32>
    %103 = arith.subf %102, %101 : vector<8x32xf32>
    %104 = math.exp %103 : vector<8x32xf32>
    %cst_57 = arith.constant 1.000000e+00 : f32
    %105 = vector.broadcast %cst_57 : f32 to vector<8x32xf32>
    %106 = arith.addf %105, %104 : vector<8x32xf32>
    %cst_58 = arith.constant 1.000000e+00 : f32
    %107 = vector.broadcast %cst_58 : f32 to vector<8x32xf32>
    %108 = arith.divf %107, %106 : vector<8x32xf32>
    %109 = arith.mulf %98, %75 : vector<8x32xf32>
    %110 = arith.mulf %90, %100 : vector<8x32xf32>
    %111 = arith.addf %109, %110 : vector<8x32xf32>
    %112 = math.tanh %111 : vector<8x32xf32>
    %113 = arith.mulf %108, %112 : vector<8x32xf32>
    %c0_59 = arith.constant 0 : index
    %c0_60 = arith.constant 0 : index
    %114 = vector.load %arg16[%c0_59, %c0_60] : memref<16x8xf32, #tpu.memory_space<vmem>>, vector<16x8xf32>
    %cst_61 = arith.constant dense<0.000000e+00> : vector<16x32xf32>
    %115 = tpu.matmul %114, %113, %cst_61 {dimension_numbers = #tpu.dot_dimension_numbers<[1], [0], [0], [1], [0, 0, 1, 1], [], []>} : vector<16x8xf32>, vector<8x32xf32>, vector<16x32xf32> -> vector<16x32xf32>
    %116 = arith.addf %47, %115 : vector<16x32xf32>
    %c0_62 = arith.constant 0 : index
    %c0_63 = arith.constant 0 : index
    %117 = vector.load %arg13[%c0_62, %c0_63] : memref<32x128xf32, #tpu.memory_space<vmem>>, vector<32x128xf32>
    %cst_64 = arith.constant dense<0.000000e+00> : vector<16x128xf32>
    %118 = tpu.matmul %17, %117, %cst_64 {dimension_numbers = #tpu.dot_dimension_numbers<[1], [0], [0], [1], [0, 0, 1, 1], [], []>} : vector<16x32xf32>, vector<32x128xf32>, vector<16x128xf32> -> vector<16x128xf32>
    %c0_65 = arith.constant 0 : index
    %c0_66 = arith.constant 0 : index
    %119 = vector.load %arg15[%c0_65, %c0_66] : memref<1x128xf32, #tpu.memory_space<vmem>>, vector<1x128xf32>
    %120 = vector.broadcast %119 : vector<1x128xf32> to vector<16x128xf32>
    %121 = arith.addf %118, %120 : vector<16x128xf32>
    %c0_67 = arith.constant 0 : index
    %c0_68 = arith.constant 0 : index
    %122 = vector.load %arg14[%c0_67, %c0_68] : memref<32x128xf32, #tpu.memory_space<vmem>>, vector<32x128xf32>
    %c0_69 = arith.constant 0 : index
    %c0_70 = arith.constant 0 : index
    %c0_71 = arith.constant 0 : index
    %123 = vector.load %arg19[%c0_69, %c0_70, %c0_71] : memref<3x4x16xf32, #tpu.memory_space<vmem>>, vector<1x4x16xf32>
    %124 = vector.shape_cast %123 : vector<1x4x16xf32> to vector<4x16xf32>
    %cst_72 = arith.constant dense<0.000000e+00> : vector<4x128xf32>
    %125 = tpu.matmul %124, %121, %cst_72 {dimension_numbers = #tpu.dot_dimension_numbers<[1], [0], [0], [1], [0, 0, 1, 1], [], []>} : vector<4x16xf32>, vector<16x128xf32>, vector<4x128xf32> -> vector<4x128xf32>
    %126 = vector.extract_strided_slice %125 {offsets = [0, 0], sizes = [4, 32], strides = [1, 1]} : vector<4x128xf32> to vector<4x32xf32>
    %cst_73 = arith.constant 0.000000e+00 : f32
    %127 = vector.broadcast %cst_73 : f32 to vector<4x32xf32>
    %128 = arith.subf %127, %126 : vector<4x32xf32>
    %129 = math.exp %128 : vector<4x32xf32>
    %cst_74 = arith.constant 1.000000e+00 : f32
    %130 = vector.broadcast %cst_74 : f32 to vector<4x32xf32>
    %131 = arith.addf %130, %129 : vector<4x32xf32>
    %cst_75 = arith.constant 1.000000e+00 : f32
    %132 = vector.broadcast %cst_75 : f32 to vector<4x32xf32>
    %133 = arith.divf %132, %131 : vector<4x32xf32>
    %134 = vector.extract_strided_slice %125 {offsets = [0, 64], sizes = [4, 32], strides = [1, 1]} : vector<4x128xf32> to vector<4x32xf32>
    %135 = math.tanh %134 : vector<4x32xf32>
    %136 = vector.extract_strided_slice %125 {offsets = [0, 96], sizes = [4, 32], strides = [1, 1]} : vector<4x128xf32> to vector<4x32xf32>
    %cst_76 = arith.constant 0.000000e+00 : f32
    %137 = vector.broadcast %cst_76 : f32 to vector<4x32xf32>
    %138 = arith.subf %137, %136 : vector<4x32xf32>
    %139 = math.exp %138 : vector<4x32xf32>
    %cst_77 = arith.constant 1.000000e+00 : f32
    %140 = vector.broadcast %cst_77 : f32 to vector<4x32xf32>
    %141 = arith.addf %140, %139 : vector<4x32xf32>
    %cst_78 = arith.constant 1.000000e+00 : f32
    %142 = vector.broadcast %cst_78 : f32 to vector<4x32xf32>
    %143 = arith.divf %142, %141 : vector<4x32xf32>
    %144 = arith.mulf %133, %135 : vector<4x32xf32>
    %145 = math.tanh %144 : vector<4x32xf32>
    %146 = arith.mulf %143, %145 : vector<4x32xf32>
    %c1_79 = arith.constant 1 : index
    %c0_80 = arith.constant 0 : index
    %c0_81 = arith.constant 0 : index
    %147 = vector.load %arg19[%c1_79, %c0_80, %c0_81] : memref<3x4x16xf32, #tpu.memory_space<vmem>>, vector<1x4x16xf32>
    %148 = vector.shape_cast %147 : vector<1x4x16xf32> to vector<4x16xf32>
    %cst_82 = arith.constant dense<0.000000e+00> : vector<4x128xf32>
    %149 = tpu.matmul %148, %121, %cst_82 {dimension_numbers = #tpu.dot_dimension_numbers<[1], [0], [0], [1], [0, 0, 1, 1], [], []>} : vector<4x16xf32>, vector<16x128xf32>, vector<4x128xf32> -> vector<4x128xf32>
    %cst_83 = arith.constant dense<0.000000e+00> : vector<4x128xf32>
    %150 = tpu.matmul %146, %122, %cst_83 {dimension_numbers = #tpu.dot_dimension_numbers<[1], [0], [0], [1], [0, 0, 1, 1], [], []>} : vector<4x32xf32>, vector<32x128xf32>, vector<4x128xf32> -> vector<4x128xf32>
    %151 = arith.addf %149, %150 : vector<4x128xf32>
    %152 = vector.extract_strided_slice %151 {offsets = [0, 0], sizes = [4, 32], strides = [1, 1]} : vector<4x128xf32> to vector<4x32xf32>
    %cst_84 = arith.constant 0.000000e+00 : f32
    %153 = vector.broadcast %cst_84 : f32 to vector<4x32xf32>
    %154 = arith.subf %153, %152 : vector<4x32xf32>
    %155 = math.exp %154 : vector<4x32xf32>
    %cst_85 = arith.constant 1.000000e+00 : f32
    %156 = vector.broadcast %cst_85 : f32 to vector<4x32xf32>
    %157 = arith.addf %156, %155 : vector<4x32xf32>
    %cst_86 = arith.constant 1.000000e+00 : f32
    %158 = vector.broadcast %cst_86 : f32 to vector<4x32xf32>
    %159 = arith.divf %158, %157 : vector<4x32xf32>
    %160 = vector.extract_strided_slice %151 {offsets = [0, 32], sizes = [4, 32], strides = [1, 1]} : vector<4x128xf32> to vector<4x32xf32>
    %cst_87 = arith.constant 0.000000e+00 : f32
    %161 = vector.broadcast %cst_87 : f32 to vector<4x32xf32>
    %162 = arith.subf %161, %160 : vector<4x32xf32>
    %163 = math.exp %162 : vector<4x32xf32>
    %cst_88 = arith.constant 1.000000e+00 : f32
    %164 = vector.broadcast %cst_88 : f32 to vector<4x32xf32>
    %165 = arith.addf %164, %163 : vector<4x32xf32>
    %cst_89 = arith.constant 1.000000e+00 : f32
    %166 = vector.broadcast %cst_89 : f32 to vector<4x32xf32>
    %167 = arith.divf %166, %165 : vector<4x32xf32>
    %168 = vector.extract_strided_slice %151 {offsets = [0, 64], sizes = [4, 32], strides = [1, 1]} : vector<4x128xf32> to vector<4x32xf32>
    %169 = math.tanh %168 : vector<4x32xf32>
    %170 = vector.extract_strided_slice %151 {offsets = [0, 96], sizes = [4, 32], strides = [1, 1]} : vector<4x128xf32> to vector<4x32xf32>
    %cst_90 = arith.constant 0.000000e+00 : f32
    %171 = vector.broadcast %cst_90 : f32 to vector<4x32xf32>
    %172 = arith.subf %171, %170 : vector<4x32xf32>
    %173 = math.exp %172 : vector<4x32xf32>
    %cst_91 = arith.constant 1.000000e+00 : f32
    %174 = vector.broadcast %cst_91 : f32 to vector<4x32xf32>
    %175 = arith.addf %174, %173 : vector<4x32xf32>
    %cst_92 = arith.constant 1.000000e+00 : f32
    %176 = vector.broadcast %cst_92 : f32 to vector<4x32xf32>
    %177 = arith.divf %176, %175 : vector<4x32xf32>
    %178 = arith.mulf %167, %144 : vector<4x32xf32>
    %179 = arith.mulf %159, %169 : vector<4x32xf32>
    %180 = arith.addf %178, %179 : vector<4x32xf32>
    %181 = math.tanh %180 : vector<4x32xf32>
    %182 = arith.mulf %177, %181 : vector<4x32xf32>
    %c2 = arith.constant 2 : index
    %c0_93 = arith.constant 0 : index
    %c0_94 = arith.constant 0 : index
    %183 = vector.load %arg19[%c2, %c0_93, %c0_94] : memref<3x4x16xf32, #tpu.memory_space<vmem>>, vector<1x4x16xf32>
    %184 = vector.shape_cast %183 : vector<1x4x16xf32> to vector<4x16xf32>
    %cst_95 = arith.constant dense<0.000000e+00> : vector<4x128xf32>
    %185 = tpu.matmul %184, %121, %cst_95 {dimension_numbers = #tpu.dot_dimension_numbers<[1], [0], [0], [1], [0, 0, 1, 1], [], []>} : vector<4x16xf32>, vector<16x128xf32>, vector<4x128xf32> -> vector<4x128xf32>
    %cst_96 = arith.constant dense<0.000000e+00> : vector<4x128xf32>
    %186 = tpu.matmul %182, %122, %cst_96 {dimension_numbers = #tpu.dot_dimension_numbers<[1], [0], [0], [1], [0, 0, 1, 1], [], []>} : vector<4x32xf32>, vector<32x128xf32>, vector<4x128xf32> -> vector<4x128xf32>
    %187 = arith.addf %185, %186 : vector<4x128xf32>
    %188 = vector.extract_strided_slice %187 {offsets = [0, 0], sizes = [4, 32], strides = [1, 1]} : vector<4x128xf32> to vector<4x32xf32>
    %cst_97 = arith.constant 0.000000e+00 : f32
    %189 = vector.broadcast %cst_97 : f32 to vector<4x32xf32>
    %190 = arith.subf %189, %188 : vector<4x32xf32>
    %191 = math.exp %190 : vector<4x32xf32>
    %cst_98 = arith.constant 1.000000e+00 : f32
    %192 = vector.broadcast %cst_98 : f32 to vector<4x32xf32>
    %193 = arith.addf %192, %191 : vector<4x32xf32>
    %cst_99 = arith.constant 1.000000e+00 : f32
    %194 = vector.broadcast %cst_99 : f32 to vector<4x32xf32>
    %195 = arith.divf %194, %193 : vector<4x32xf32>
    %196 = vector.extract_strided_slice %187 {offsets = [0, 32], sizes = [4, 32], strides = [1, 1]} : vector<4x128xf32> to vector<4x32xf32>
    %cst_100 = arith.constant 0.000000e+00 : f32
    %197 = vector.broadcast %cst_100 : f32 to vector<4x32xf32>
    %198 = arith.subf %197, %196 : vector<4x32xf32>
    %199 = math.exp %198 : vector<4x32xf32>
    %cst_101 = arith.constant 1.000000e+00 : f32
    %200 = vector.broadcast %cst_101 : f32 to vector<4x32xf32>
    %201 = arith.addf %200, %199 : vector<4x32xf32>
    %cst_102 = arith.constant 1.000000e+00 : f32
    %202 = vector.broadcast %cst_102 : f32 to vector<4x32xf32>
    %203 = arith.divf %202, %201 : vector<4x32xf32>
    %204 = vector.extract_strided_slice %187 {offsets = [0, 64], sizes = [4, 32], strides = [1, 1]} : vector<4x128xf32> to vector<4x32xf32>
    %205 = math.tanh %204 : vector<4x32xf32>
    %206 = vector.extract_strided_slice %187 {offsets = [0, 96], sizes = [4, 32], strides = [1, 1]} : vector<4x128xf32> to vector<4x32xf32>
    %cst_103 = arith.constant 0.000000e+00 : f32
    %207 = vector.broadcast %cst_103 : f32 to vector<4x32xf32>
    %208 = arith.subf %207, %206 : vector<4x32xf32>
    %209 = math.exp %208 : vector<4x32xf32>
    %cst_104 = arith.constant 1.000000e+00 : f32
    %210 = vector.broadcast %cst_104 : f32 to vector<4x32xf32>
    %211 = arith.addf %210, %209 : vector<4x32xf32>
    %cst_105 = arith.constant 1.000000e+00 : f32
    %212 = vector.broadcast %cst_105 : f32 to vector<4x32xf32>
    %213 = arith.divf %212, %211 : vector<4x32xf32>
    %214 = arith.mulf %203, %180 : vector<4x32xf32>
    %215 = arith.mulf %195, %205 : vector<4x32xf32>
    %216 = arith.addf %214, %215 : vector<4x32xf32>
    %217 = math.tanh %216 : vector<4x32xf32>
    %218 = arith.mulf %213, %217 : vector<4x32xf32>
    %c0_106 = arith.constant 0 : index
    %c0_107 = arith.constant 0 : index
    %219 = vector.load %arg17[%c0_106, %c0_107] : memref<16x4xf32, #tpu.memory_space<vmem>>, vector<16x4xf32>
    %cst_108 = arith.constant dense<0.000000e+00> : vector<16x32xf32>
    %220 = tpu.matmul %219, %218, %cst_108 {dimension_numbers = #tpu.dot_dimension_numbers<[1], [0], [0], [1], [0, 0, 1, 1], [], []>} : vector<16x4xf32>, vector<4x32xf32>, vector<16x32xf32> -> vector<16x32xf32>
    %221 = arith.addf %116, %220 : vector<16x32xf32>
    %cst_109 = arith.constant 0.333333343 : f32
    %222 = vector.broadcast %cst_109 : f32 to vector<16x32xf32>
    %223 = arith.mulf %221, %222 : vector<16x32xf32>
    %c0_110 = arith.constant 0 : index
    %c0_111 = arith.constant 0 : index
    %224 = vector.load %arg20[%c0_110, %c0_111] : memref<16x32xf32, #tpu.memory_space<vmem>>, vector<16x32xf32>
    tpu.vector_store %arg20[%c0_110, %c0_111], %223 {strides = array<i32>} : memref<16x32xf32, #tpu.memory_space<vmem>>, vector<16x32xf32>,
    return
  }
}

</mosaic_0001>

<llo_original>
// kernel: dtgl_forward.1
$region0: #{dtgl_forward.1}
  #allocation0 [shape = 'u32[]', space=smem, size = 0x4, offset = 0x4, fixed_abs, tag = 'smem constant byte address 0x4 - core index']
  #allocation1 [shape = 'u32[144,128]{1,0:T(1,128)}', space=vmem, size = 0x12000, scoped, tag = 'internal scratch']
  %s0 = inlined_call_operand.hbm [shape: f32[16,16], index: 0, kind: input, shape index: {}]
  %s1 = inlined_call_operand.vmem [shape: f32[16,16], index: 1, kind: input, shape index: {}]
  %s2 = inlined_call_operand.hbm [shape: f32[16,1], index: 2, kind: input, shape index: {}]
  %s3 = inlined_call_operand.hbm [shape: f32[16,32], index: 3, kind: input, shape index: {}]
  %s4 = inlined_call_operand.vmem [shape: f32[1,32], index: 4, kind: input, shape index: {}]
  %s5 = inlined_call_operand.vmem [shape: f32[32,32], index: 5, kind: input, shape index: {}]
  %s6 = inlined_call_operand.hbm [shape: f32[1,32], index: 6, kind: input, shape index: {}]
  %s7 = inlined_call_operand.vmem [shape: f32[32,128], index: 7, kind: input, shape index: {}]
  %s8 = inlined_call_operand.vmem [shape: f32[32,128], index: 8, kind: input, shape index: {}]
  %s9 = inlined_call_operand.hbm [shape: f32[1,128], index: 9, kind: input, shape index: {}]
  %s10 = inlined_call_operand.vmem [shape: f32[32,128], index: 10, kind: input, shape index: {}]
  %s11 = inlined_call_operand.hbm [shape: f32[32,128], index: 11, kind: input, shape index: {}]
  %s12 = inlined_call_operand.hbm [shape: f32[1,128], index: 12, kind: input, shape index: {}]
  %s13 = inlined_call_operand.hbm [shape: f32[32,128], index: 13, kind: input, shape index: {}]
  %s14 = inlined_call_operand.hbm [shape: f32[32,128], index: 14, kind: input, shape index: {}]
  %s15 = inlined_call_operand.hbm [shape: f32[1,128], index: 15, kind: input, shape index: {}]
  %s16 = inlined_call_operand.hbm [shape: f32[16,8], index: 16, kind: input, shape index: {}]
  %s17 = inlined_call_operand.vmem [shape: f32[16,4], index: 17, kind: input, shape index: {}]
  %s18 = inlined_call_operand.vmem [shape: f32[2,8,16], index: 18, kind: input, shape index: {}]
  %s19 = inlined_call_operand.hbm [shape: f32[3,4,16], index: 19, kind: input, shape index: {}]
  %s20 = inlined_call_operand.hbm [shape: f32[16,32], index: 20, kind: output, shape index: {}]
  %s21 = sld [smem:[#allocation0]]
  $region138: #{dtgl_forward.1} parent=0
    _
  %s23 = ssub.s32 1, %s21
  %s24 = scalar_select 0, %s23, %s21
  $region1: #{dtgl_forward.1} parent=0
    #allocation2 [shape = 'u8[8192]{0}', space=vmem, size = 0x2000, scoped, tag = 'input window, operand 0, single buffered']
    #allocation3 [shape = 's32[1]{0}', space=sflag, size = 0x4, scoped, tag = 'scoped memory for dtgl_forward.1']
    #allocation4 [shape = 's32[1]{0}', space=sflag, size = 0x4, scoped, tag = 'scoped memory for dtgl_forward.1']
    #allocation5 [shape = 'u8[8192]{0}', space=vmem, size = 0x2000, scoped, tag = 'input window, operand 2, single buffered']
    #allocation6 [shape = 's32[1]{0}', space=sflag, size = 0x4, scoped, tag = 'scoped memory for dtgl_forward.1']
    #allocation7 [shape = 'u8[8192]{0}', space=vmem, size = 0x2000, scoped, tag = 'input window, operand 3, single buffered']
    #allocation8 [shape = 'u8[512]{0}', space=vmem, size = 0x400, scoped, tag = 'input window, operand 6, single buffered']
    #allocation9 [shape = 's32[1]{0}', space=sflag, size = 0x4, scoped, tag = 'scoped memory for dtgl_forward.1']
    #allocation10 [shape = 'u8[512]{0}', space=vmem, size = 0x400, scoped, tag = 'input window, operand 9, single buffered']
    #allocation11 [shape = 'u8[16384]{0}', space=vmem, size = 0x4000, scoped, tag = 'input window, operand 11, single buffered']
    #allocation12 [shape = 's32[1]{0}', space=sflag, size = 0x4, scoped, tag = 'scoped memory for dtgl_forward.1']
    #allocation13 [shape = 'u8[512]{0}', space=vmem, size = 0x400, scoped, tag = 'input window, operand 12, single buffered']
    #allocation14 [shape = 'u8[16384]{0}', space=vmem, size = 0x4000, scoped, tag = 'input window, operand 13, single buffered']
    #allocation15 [shape = 's32[1]{0}', space=sflag, size = 0x4, scoped, tag = 'scoped memory for dtgl_forward.1']
    #allocation16 [shape = 'u8[16384]{0}', space=vmem, size = 0x4000, scoped, tag = 'input window, operand 14, single buffered']
    #allocation17 [shape = 'u8[512]{0}', space=vmem, size = 0x400, scoped, tag = 'input window, operand 15, single buffered']
    #allocation18 [shape = 's32[1]{0}', space=sflag, size = 0x4, scoped, tag = 'scoped memory for dtgl_forward.1']
    #allocation19 [shape = 'u8[8192]{0}', space=vmem, size = 0x2000, scoped, tag = 'input window, operand 16, single buffered']
    #allocation20 [shape = 'u8[6144]{0}', space=vmem, size = 0x1800, scoped, tag = 'input window, operand 19, single buffered']
    #allocation21 [shape = 's32[1]{0}', space=sflag, size = 0x4, scoped, tag = 'scoped memory for dtgl_forward.1']
    #allocation22 [shape = 'u8[8192]{0}', space=vmem, size = 0x2000, scoped, tag = 'output window, operand 0, single buffered']
    %25 = vsyncpa [#allocation3], 0
    %26 = vsyncpa [#allocation6], 0
    %27 = vsyncpa [#allocation9], 0
    %28 = vsyncpa [#allocation12], 0
    %29 = vsyncpa [#allocation15], 0
    %30 = vsyncpa [#allocation18], 0
    %31 = vsyncpa [#allocation21], 0
    %32 = vsyncpa [#allocation4], 0
    // Predicated region
    $region2: #{dtgl_forward.1} parent=1 // pred_check
      _
    $region3: #{dtgl_forward.1} parent=1 // pred_check_branch
      %34 = sbr.rel (0) target = $region5
    $region4: #{dtgl_forward.1} parent=1 // pred_region
      %s36 = ssub.s32 256, 256
      %37 = vsyncadd [#allocation3], %s36
      %s38 = sshll.u32 [#allocation2], 4
      %s39 = int_to_ptr.vmem [resolvable:$true] %s38
      %44 = dma.hbm_to_vmem [thread:$0]  %s0, 256, %s39, [#allocation3], 128, 128, 8
    $region5: #{dtgl_forward.1} parent=1 // pred_fallthru
      _
    // Predicated region
    $region6: #{dtgl_forward.1} parent=1 // pred_check
      _
    $region7: #{dtgl_forward.1} parent=1 // pred_check_branch
      %46 = sbr.rel (0) target = $region9
    $region8: #{dtgl_forward.1} parent=1 // pred_region
      _
    $region9: #{dtgl_forward.1} parent=1 // pred_fallthru
      _
    // Predicated region
    $region10: #{dtgl_forward.1} parent=1 // pred_check
      _
    $region11: #{dtgl_forward.1} parent=1 // pred_check_branch
      %48 = sbr.rel (0) target = $region13
    $region12: #{dtgl_forward.1} parent=1 // pred_region
      %s50 = ssub.s32 256, 256
      %51 = vsyncadd [#allocation6], %s50
      %s52 = sshll.u32 [#allocation5], 4
      %s53 = int_to_ptr.vmem [resolvable:$true] %s52
      %58 = dma.hbm_to_vmem [thread:$0]  %s2, 256, %s53, [#allocation6], 128, 128, 8
    $region13: #{dtgl_forward.1} parent=1 // pred_fallthru
      _
    // Predicated region
    $region14: #{dtgl_forward.1} parent=1 // pred_check
      _
    $region15: #{dtgl_forward.1} parent=1 // pred_check_branch
      %60 = sbr.rel (0) target = $region17
    $region16: #{dtgl_forward.1} parent=1 // pred_region
      %s62 = ssub.s32 256, 256
      %63 = vsyncadd [#allocation6], %s62
      %s64 = sshll.u32 [#allocation7], 4
      %s65 = int_to_ptr.vmem [resolvable:$true] %s64
      %70 = dma.hbm_to_vmem [thread:$0]  %s3, 256, %s65, [#allocation6], 128, 128, 8
    $region17: #{dtgl_forward.1} parent=1 // pred_fallthru
      _
    // Predicated region
    $region18: #{dtgl_forward.1} parent=1 // pred_check
      _
    $region19: #{dtgl_forward.1} parent=1 // pred_check_branch
      %72 = sbr.rel (0) target = $region21
    $region20: #{dtgl_forward.1} parent=1 // pred_region
      _
    $region21: #{dtgl_forward.1} parent=1 // pred_fallthru
      _
    // Predicated region
    $region22: #{dtgl_forward.1} parent=1 // pred_check
      _
    $region23: #{dtgl_forward.1} parent=1 // pred_check_branch
      %74 = sbr.rel (0) target = $region25
    $region24: #{dtgl_forward.1} parent=1 // pred_region
      _
    $region25: #{dtgl_forward.1} parent=1 // pred_fallthru
      _
    // Predicated region
    $region26: #{dtgl_forward.1} parent=1 // pred_check
      _
    $region27: #{dtgl_forward.1} parent=1 // pred_check_branch
      %76 = sbr.rel (0) target = $region29
    $region28: #{dtgl_forward.1} parent=1 // pred_region
      %s78 = ssub.s32 16, 16
      %79 = vsyncadd [#allocation9], %s78
      %s81 = sshll.u32 [#allocation8], 4
      %s82 = int_to_ptr.vmem [resolvable:$true] %s81
      %84 = dma.hbm_to_vmem [thread:$0]  %s6, 16, %s82, [#allocation9]
    $region29: #{dtgl_forward.1} parent=1 // pred_fallthru
      _
    // Predicated region
    $region30: #{dtgl_forward.1} parent=1 // pred_check
      _
    $region31: #{dtgl_forward.1} parent=1 // pred_check_branch
      %86 = sbr.rel (0) target = $region33
    $region32: #{dtgl_forward.1} parent=1 // pred_region
      _
    $region33: #{dtgl_forward.1} parent=1 // pred_fallthru
      _
    // Predicated region
    $region34: #{dtgl_forward.1} parent=1 // pred_check
      _
    $region35: #{dtgl_forward.1} parent=1 // pred_check_branch
      %88 = sbr.rel (0) target = $region37
    $region36: #{dtgl_forward.1} parent=1 // pred_region
      _
    $region37: #{dtgl_forward.1} parent=1 // pred_fallthru
      _
    // Predicated region
    $region38: #{dtgl_forward.1} parent=1 // pred_check
      _
    $region39: #{dtgl_forward.1} parent=1 // pred_check_branch
      %90 = sbr.rel (0) target = $region41
    $region40: #{dtgl_forward.1} parent=1 // pred_region
      %s92 = ssub.s32 16, 16
      %93 = vsyncadd [#allocation9], %s92
      %s95 = sshll.u32 [#allocation10], 4
      %s96 = int_to_ptr.vmem [resolvable:$true] %s95
      %98 = dma.hbm_to_vmem [thread:$0]  %s9, 16, %s96, [#allocation9]
    $region41: #{dtgl_forward.1} parent=1 // pred_fallthru
      _
    // Predicated region
    $region42: #{dtgl_forward.1} parent=1 // pred_check
      _
    $region43: #{dtgl_forward.1} parent=1 // pred_check_branch
      %100 = sbr.rel (0) target = $region45
    $region44: #{dtgl_forward.1} parent=1 // pred_region
      _
    $region45: #{dtgl_forward.1} parent=1 // pred_fallthru
      _
    // Predicated region
    $region46: #{dtgl_forward.1} parent=1 // pred_check
      _
    $region47: #{dtgl_forward.1} parent=1 // pred_check_branch
      %102 = sbr.rel (0) target = $region49
    $region48: #{dtgl_forward.1} parent=1 // pred_region
      %s104 = ssub.s32 512, 512
      %105 = vsyncadd [#allocation12], %s104
      %s106 = sshll.u32 [#allocation11], 4
      %s107 = int_to_ptr.vmem [resolvable:$true] %s106
      %112 = dma.hbm_to_vmem [thread:$0]  %s11, 512, %s107, [#allocation12], 128, 128, 8
    $region49: #{dtgl_forward.1} parent=1 // pred_fallthru
      _
    // Predicated region
    $region50: #{dtgl_forward.1} parent=1 // pred_check
      _
    $region51: #{dtgl_forward.1} parent=1 // pred_check_branch
      %114 = sbr.rel (0) target = $region53
    $region52: #{dtgl_forward.1} parent=1 // pred_region
      %s116 = ssub.s32 16, 16
      %117 = vsyncadd [#allocation12], %s116
      %s119 = sshll.u32 [#allocation13], 4
      %s120 = int_to_ptr.vmem [resolvable:$true] %s119
      %122 = dma.hbm_to_vmem [thread:$0]  %s12, 16, %s120, [#allocation12]
    $region53: #{dtgl_forward.1} parent=1 // pred_fallthru
      _
    // Predicated region
    $region54: #{dtgl_forward.1} parent=1 // pred_check
      _
    $region55: #{dtgl_forward.1} parent=1 // pred_check_branch
      %124 = sbr.rel (0) target = $region57
    $region56: #{dtgl_forward.1} parent=1 // pred_region
      %s126 = ssub.s32 512, 512
      %127 = vsyncadd [#allocation15], %s126
      %s128 = sshll.u32 [#allocation14], 4
      %s129 = int_to_ptr.vmem [resolvable:$true] %s128
      %134 = dma.hbm_to_vmem [thread:$0]  %s13, 512, %s129, [#allocation15], 128, 128, 8
    $region57: #{dtgl_forward.1} parent=1 // pred_fallthru
      _
    // Predicated region
    $region58: #{dtgl_forward.1} parent=1 // pred_check
      _
    $region59: #{dtgl_forward.1} parent=1 // pred_check_branch
      %136 = sbr.rel (0) target = $region61
    $region60: #{dtgl_forward.1} parent=1 // pred_region
      %s138 = ssub.s32 512, 512
      %139 = vsyncadd [#allocation15], %s138
      %s140 = sshll.u32 [#allocation16], 4
      %s141 = int_to_ptr.vmem [resolvable:$true] %s140
      %146 = dma.hbm_to_vmem [thread:$0]  %s14, 512, %s141, [#allocation15], 128, 128, 8
    $region61: #{dtgl_forward.1} parent=1 // pred_fallthru
      _
    // Predicated region
    $region62: #{dtgl_forward.1} parent=1 // pred_check
      _
    $region63: #{dtgl_forward.1} parent=1 // pred_check_branch
      %148 = sbr.rel (0) target = $region65
    $region64: #{dtgl_forward.1} parent=1 // pred_region
      %s150 = ssub.s32 16, 16
      %151 = vsyncadd [#allocation18], %s150
      %s153 = sshll.u32 [#allocation17], 4
      %s154 = int_to_ptr.vmem [resolvable:$true] %s153
      %156 = dma.hbm_to_vmem [thread:$0]  %s15, 16, %s154, [#allocation18]
    $region65: #{dtgl_forward.1} parent=1 // pred_fallthru
      _
    // Predicated region
    $region66: #{dtgl_forward.1} parent=1 // pred_check
      _
    $region67: #{dtgl_forward.1} parent=1 // pred_check_branch
      %158 = sbr.rel (0) target = $region69
    $region68: #{dtgl_forward.1} parent=1 // pred_region
      %s160 = ssub.s32 256, 256
      %161 = vsyncadd [#allocation18], %s160
      %s162 = sshll.u32 [#allocation19], 4
      %s163 = int_to_ptr.vmem [resolvable:$true] %s162
      %168 = dma.hbm_to_vmem [thread:$0]  %s16, 256, %s163, [#allocation18], 128, 128, 8
    $region69: #{dtgl_forward.1} parent=1 // pred_fallthru
      _
    // Predicated region
    $region70: #{dtgl_forward.1} parent=1 // pred_check
      _
    $region71: #{dtgl_forward.1} parent=1 // pred_check_branch
      %170 = sbr.rel (0) target = $region73
    $region72: #{dtgl_forward.1} parent=1 // pred_region
      _
    $region73: #{dtgl_forward.1} parent=1 // pred_fallthru
      _
    // Predicated region
    $region74: #{dtgl_forward.1} parent=1 // pred_check
      _
    $region75: #{dtgl_forward.1} parent=1 // pred_check_branch
      %172 = sbr.rel (0) target = $region77
    $region76: #{dtgl_forward.1} parent=1 // pred_region
      _
    $region77: #{dtgl_forward.1} parent=1 // pred_fallthru
      _
    // Predicated region
    $region78: #{dtgl_forward.1} parent=1 // pred_check
      _
    $region79: #{dtgl_forward.1} parent=1 // pred_check_branch
      %174 = sbr.rel (0) target = $region81
    $region80: #{dtgl_forward.1} parent=1 // pred_region
      %s176 = ssub.s32 192, 192
      %177 = vsyncadd [#allocation21], %s176
      %s178 = sshll.u32 [#allocation20], 4
      %s179 = int_to_ptr.vmem [resolvable:$true] %s178
      %184 = dma.hbm_to_vmem [thread:$0]  %s19, 192, %s179, [#allocation21], 64, 64, 4
    $region81: #{dtgl_forward.1} parent=1 // pred_fallthru
      _
    // Predicated region
    $region82: #{dtgl_forward.1} parent=1 // pred_check
      _
    $region83: #{dtgl_forward.1} parent=1 // pred_check_branch
      %186 = sbr.rel (0) target = $region85
    $region84: #{dtgl_forward.1} parent=1 // pred_region
      %187 = dma.done [#allocation3], 256
    $region85: #{dtgl_forward.1} parent=1 // pred_fallthru
      _
    // Predicated region
    $region86: #{dtgl_forward.1} parent=1 // pred_check
      _
    $region87: #{dtgl_forward.1} parent=1 // pred_check_branch
      %189 = sbr.rel (0) target = $region89
    $region88: #{dtgl_forward.1} parent=1 // pred_region
      %190 = dma.done [#allocation6], 256
    $region89: #{dtgl_forward.1} parent=1 // pred_fallthru
      _
    // Predicated region
    $region90: #{dtgl_forward.1} parent=1 // pred_check
      _
    $region91: #{dtgl_forward.1} parent=1 // pred_check_branch
      %192 = sbr.rel (0) target = $region93
    $region92: #{dtgl_forward.1} parent=1 // pred_region
      %193 = dma.done [#allocation6], 256
    $region93: #{dtgl_forward.1} parent=1 // pred_fallthru
      _
    // Predicated region
    $region94: #{dtgl_forward.1} parent=1 // pred_check
      _
    $region95: #{dtgl_forward.1} parent=1 // pred_check_branch
      %195 = sbr.rel (0) target = $region97
    $region96: #{dtgl_forward.1} parent=1 // pred_region
      %196 = dma.done [#allocation9], 16
    $region97: #{dtgl_forward.1} parent=1 // pred_fallthru
      _
    // Predicated region
    $region98: #{dtgl_forward.1} parent=1 // pred_check
      _
    $region99: #{dtgl_forward.1} parent=1 // pred_check_branch
      %198 = sbr.rel (0) target = $region101
    $region100: #{dtgl_forward.1} parent=1 // pred_region
      %199 = dma.done [#allocation9], 16
    $region101: #{dtgl_forward.1} parent=1 // pred_fallthru
      _
    // Predicated region
    $region102: #{dtgl_forward.1} parent=1 // pred_check
      _
    $region103: #{dtgl_forward.1} parent=1 // pred_check_branch
      %201 = sbr.rel (0) target = $region105
    $region104: #{dtgl_forward.1} parent=1 // pred_region
      %202 = dma.done [#allocation12], 512
    $region105: #{dtgl_forward.1} parent=1 // pred_fallthru
      _
    // Predicated region
    $region106: #{dtgl_forward.1} parent=1 // pred_check
      _
    $region107: #{dtgl_forward.1} parent=1 // pred_check_branch
      %204 = sbr.rel (0) target = $region109
    $region108: #{dtgl_forward.1} parent=1 // pred_region
      %205 = dma.done [#allocation12], 16
    $region109: #{dtgl_forward.1} parent=1 // pred_fallthru
      _
    // Predicated region
    $region110: #{dtgl_forward.1} parent=1 // pred_check
      _
    $region111: #{dtgl_forward.1} parent=1 // pred_check_branch
      %207 = sbr.rel (0) target = $region113
    $region112: #{dtgl_forward.1} parent=1 // pred_region
      %208 = dma.done [#allocation15], 512
    $region113: #{dtgl_forward.1} parent=1 // pred_fallthru
      _
    // Predicated region
    $region114: #{dtgl_forward.1} parent=1 // pred_check
      _
    $region115: #{dtgl_forward.1} parent=1 // pred_check_branch
      %210 = sbr.rel (0) target = $region117
    $region116: #{dtgl_forward.1} parent=1 // pred_region
      %211 = dma.done [#allocation15], 512
    $region117: #{dtgl_forward.1} parent=1 // pred_fallthru
      _
    // Predicated region
    $region118: #{dtgl_forward.1} parent=1 // pred_check
      _
    $region119: #{dtgl_forward.1} parent=1 // pred_check_branch
      %213 = sbr.rel (0) target = $region121
    $region120: #{dtgl_forward.1} parent=1 // pred_region
      %214 = dma.done [#allocation18], 16
    $region121: #{dtgl_forward.1} parent=1 // pred_fallthru
      _
    // Predicated region
    $region122: #{dtgl_forward.1} parent=1 // pred_check
      _
    $region123: #{dtgl_forward.1} parent=1 // pred_check_branch
      %216 = sbr.rel (0) target = $region125
    $region124: #{dtgl_forward.1} parent=1 // pred_region
      %217 = dma.done [#allocation18], 256
    $region125: #{dtgl_forward.1} parent=1 // pred_fallthru
      _
    // Predicated region
    $region126: #{dtgl_forward.1} parent=1 // pred_check
      _
    $region127: #{dtgl_forward.1} parent=1 // pred_check_branch
      %219 = sbr.rel (0) target = $region129
    $region128: #{dtgl_forward.1} parent=1 // pred_region
      %220 = dma.done [#allocation21], 192
    $region129: #{dtgl_forward.1} parent=1 // pred_fallthru
      _
    %v221 = vld [vmem:[%s1] sm:$0xff]
    %v222 = vld [vmem:[%s1 + $0x8] sm:$0xff]
    %v223 = vld [vmem:[#allocation2] sm:$0xff]
    %v224 = vld [vmem:[#allocation2 + $0x8] sm:$0xff]
    %v225 = vld [vmem:[#allocation7] sm:$0xff]
    %v226 = vld [vmem:[#allocation7 + $0x8] sm:$0xff]
    %v227 = vld [vmem:[%s4] sm:$0x1]
    %v229 = vlaneseq
    %v230 = vshrl.u32 %v229, 7
    %v231 = vsub.s32 0, %v230
    %v232 = vrot.slane %v227, %v231
    %vm234 = vcmask 130048
    %v236 = vsel %vm234, %v223, 0
    %v239 = vsel %vm234, %v224, 0
    %241 = vmatprep.subr.mxu0 0.0
    %242 = vmatpush1.msra.mxu0 %v225
    %243 = vmatprep.subr.mxu0 0.0
    %244 = vmatpush1.msra.mxu0 %v226
    %245 = vmatprep.subr.mxu0 0.0
    %246 = vmatpush1.msra.mxu0 0.0
    %247 = vmatprep.subr.mxu0 0.0
    %248 = vmatpush1.msra.mxu0 0.0
    %249 = vmatprep.subr.mxu0 0.0
    %250 = vmatpush1.msra.mxu0 0.0
    %251 = vmatprep.subr.mxu0 0.0
    %252 = vmatpush1.msra.mxu0 0.0
    %253 = vmatprep.subr.mxu0 0.0
    %254 = vmatpush1.msra.mxu0 0.0
    %255 = vmatprep.subr.mxu0 0.0
    %256 = vmatpush1.msra.mxu0 0.0
    %257 = vmatprep.subr.mxu0 0.0
    %258 = vmatpush1.msra.mxu0 0.0
    %259 = vmatprep.subr.mxu0 0.0
    %260 = vmatpush1.msra.mxu0 0.0
    %261 = vmatprep.subr.mxu0 0.0
    %262 = vmatpush1.msra.mxu0 0.0
    %263 = vmatprep.subr.mxu0 0.0
    %264 = vmatpush1.msra.mxu0 0.0
    %265 = vmatprep.subr.mxu0 0.0
    %266 = vmatpush1.msra.mxu0 0.0
    %267 = vmatprep.subr.mxu0 0.0
    %268 = vmatpush1.msra.mxu0 0.0
    %269 = vmatprep.subr.mxu0 0.0
    %270 = vmatpush1.msra.mxu0 0.0
    %271 = vmatprep.subr.mxu0 0.0
    %272 = vmatpush1.msra.mxu0 0.0
    %273 = vmatprep.subr.mxu0 0.0
    %274 = vmatpush1.msra.mxu0 0.0
    %275 = vmatprep.subr.mxu0 0.0
    %276 = vmatpush1.msra.mxu0 0.0
    %277 = vmatprep.subr.mxu0 0.0
    %278 = vmatpush1.msra.mxu0 0.0
    %279 = vmatprep.subr.mxu0 0.0
    %280 = vmatpush1.msra.mxu0 0.0
    %281 = vmatprep.subr.mxu0 0.0
    %282 = vmatpush1.msra.mxu0 0.0
    %283 = vmatprep.subr.mxu0 0.0
    %284 = vmatpush1.msra.mxu0 0.0
    %285 = vmatprep.subr.mxu0 0.0
    %286 = vmatpush1.msra.mxu0 0.0
    %287 = vmatprep.subr.mxu0 0.0
    %288 = vmatpush1.msra.mxu0 0.0
    %289 = vmatprep.subr.mxu0 0.0
    %290 = vmatpush1.msra.mxu0 0.0
    %291 = vmatprep.subr.mxu0 0.0
    %292 = vmatpush1.msra.mxu0 0.0
    %293 = vmatprep.subr.mxu0 0.0
    %294 = vmatpush1.msra.mxu0 0.0
    %295 = vmatprep.subr.mxu0 0.0
    %296 = vmatpush1.msra.mxu0 0.0
    %297 = vmatprep.subr.mxu0 0.0
    %298 = vmatpush1.msra.mxu0 0.0
    %299 = vmatprep.subr.mxu0 0.0
    %300 = vmatpush1.msra.mxu0 0.0
    %301 = vmatprep.subr.mxu0 0.0
    %302 = vmatpush1.msra.mxu0 0.0
    %303 = vmatprep.subr.mxu0 0.0
    %304 = vmatpush1.msra.mxu0 0.0
    %305 = vmatprep.mubr.f32.mxu0 0.0
    %306 = vmatmul.mubr.f32.gmra.mrb[0].mxu0 %v236
    %v307 = vpop.f32.mrb[0].mxu0
    %v308 = vadd.f32 %v232, %v307
    %v309 = vpop.f32.mrb[0].mxu0
    %310 = vmatprep.mubr.f32.mxu0 0.0
    %311 = vmatmul.mubr.f32.gmra.mrb[0].mxu0 %v239
    %v312 = vpop.f32.mrb[0].mxu0
    %v313 = vadd.f32 %v232, %v312
    %v314 = vpop.f32.mrb[0].mxu0
    %315 = vdwg.mxu0
    %v317 = vsel %vm234, %v221, 0
    %v320 = vsel %vm234, %v222, 0
    %322 = vmatprep.subr.mxu0 0.0
    %323 = vmatpush1.msra.mxu0 %v308
    %324 = vmatprep.subr.mxu0 0.0
    %325 = vmatpush1.msra.mxu0 %v313
    %326 = vmatprep.subr.mxu0 0.0
    %327 = vmatpush1.msra.mxu0 0.0
    %328 = vmatprep.subr.mxu0 0.0
    %329 = vmatpush1.msra.mxu0 0.0
    %330 = vmatprep.subr.mxu0 0.0
    %331 = vmatpush1.msra.mxu0 0.0
    %332 = vmatprep.subr.mxu0 0.0
    %333 = vmatpush1.msra.mxu0 0.0
    %334 = vmatprep.subr.mxu0 0.0
    %335 = vmatpush1.msra.mxu0 0.0
    %336 = vmatprep.subr.mxu0 0.0
    %337 = vmatpush1.msra.mxu0 0.0
    %338 = vmatprep.subr.mxu0 0.0
    %339 = vmatpush1.msra.mxu0 0.0
    %340 = vmatprep.subr.mxu0 0.0
    %341 = vmatpush1.msra.mxu0 0.0
    %342 = vmatprep.subr.mxu0 0.0
    %343 = vmatpush1.msra.mxu0 0.0
    %344 = vmatprep.subr.mxu0 0.0
    %345 = vmatpush1.msra.mxu0 0.0
    %346 = vmatprep.subr.mxu0 0.0
    %347 = vmatpush1.msra.mxu0 0.0
    %348 = vmatprep.subr.mxu0 0.0
    %349 = vmatpush1.msra.mxu0 0.0
    %350 = vmatprep.subr.mxu0 0.0
    %351 = vmatpush1.msra.mxu0 0.0
    %352 = vmatprep.subr.mxu0 0.0
    %353 = vmatpush1.msra.mxu0 0.0
    %354 = vmatprep.subr.mxu0 0.0
    %355 = vmatpush1.msra.mxu0 0.0
    %356 = vmatprep.subr.mxu0 0.0
    %357 = vmatpush1.msra.mxu0 0.0
    %358 = vmatprep.subr.mxu0 0.0
    %359 = vmatpush1.msra.mxu0 0.0
    %360 = vmatprep.subr.mxu0 0.0
    %361 = vmatpush1.msra.mxu0 0.0
    %362 = vmatprep.subr.mxu0 0.0
    %363 = vmatpush1.msra.mxu0 0.0
    %364 = vmatprep.subr.mxu0 0.0
    %365 = vmatpush1.msra.mxu0 0.0
    %366 = vmatprep.subr.mxu0 0.0
    %367 = vmatpush1.msra.mxu0 0.0
    %368 = vmatprep.subr.mxu0 0.0
    %369 = vmatpush1.msra.mxu0 0.0
    %370 = vmatprep.subr.mxu0 0.0
    %371 = vmatpush1.msra.mxu0 0.0
    %372 = vmatprep.subr.mxu0 0.0
    %373 = vmatpush1.msra.mxu0 0.0
    %374 = vmatprep.subr.mxu0 0.0
    %375 = vmatpush1.msra.mxu0 0.0
    %376 = vmatprep.subr.mxu0 0.0
    %377 = vmatpush1.msra.mxu0 0.0
    %378 = vmatprep.subr.mxu0 0.0
    %379 = vmatpush1.msra.mxu0 0.0
    %380 = vmatprep.subr.mxu0 0.0
    %381 = vmatpush1.msra.mxu0 0.0
    %382 = vmatprep.subr.mxu0 0.0
    %383 = vmatpush1.msra.mxu0 0.0
    %384 = vmatprep.subr.mxu0 0.0
    %385 = vmatpush1.msra.mxu0 0.0
    %386 = vmatprep.mubr.f32.mxu0 0.0
    %387 = vmatmul.mubr.f32.gmra.mrb[0].mxu0 %v317
    %v388 = vpop.f32.mrb[0].mxu0
    %v389 = vadd.f32 0.0, %v388
    %v390 = vpop.f32.mrb[0].mxu0
    %391 = vmatprep.mubr.f32.mxu0 0.0
    %392 = vmatmul.mubr.f32.gmra.mrb[0].mxu0 %v320
    %v393 = vpop.f32.mrb[0].mxu0
    %v394 = vadd.f32 0.0, %v393
    %v395 = vpop.f32.mrb[0].mxu0
    %396 = vdwg.mxu0
    %v397 = vmax.f32 %v389, 0.0
    %v398 = vmax.f32 %v394, 0.0
    %v399 = vld [vmem:[%s5] sm:$0xff]
    %v400 = vld [vmem:[%s5 + $0x8] sm:$0xff]
    %v401 = vld [vmem:[%s5 + $0x10] sm:$0xff]
    %v402 = vld [vmem:[%s5 + $0x18] sm:$0xff]
    %v403 = vld [vmem:[#allocation8] sm:$0x1]
    %v405 = vlaneseq
    %v406 = vshrl.u32 %v405, 7
    %v407 = vsub.s32 0, %v406
    %v408 = vrot.slane %v403, %v407
    %vm410 = vcmask 261120
    %v412 = vsel %vm410, %v397, 0
    %v415 = vsel %vm410, %v398, 0
    %417 = vmatprep.subr.mxu0 0.0
    %418 = vmatpush1.msra.mxu0 %v399
    %419 = vmatprep.subr.mxu0 0.0
    %420 = vmatpush1.msra.mxu0 %v400
    %421 = vmatprep.subr.mxu0 0.0
    %422 = vmatpush1.msra.mxu0 %v401
    %423 = vmatprep.subr.mxu0 0.0
    %424 = vmatpush1.msra.mxu0 %v402
    %425 = vmatprep.subr.mxu0 0.0
    %426 = vmatpush1.msra.mxu0 0.0
    %427 = vmatprep.subr.mxu0 0.0
    %428 = vmatpush1.msra.mxu0 0.0
    %429 = vmatprep.subr.mxu0 0.0
    %430 = vmatpush1.msra.mxu0 0.0
    %431 = vmatprep.subr.mxu0 0.0
    %432 = vmatpush1.msra.mxu0 0.0
    %433 = vmatprep.subr.mxu0 0.0
    %434 = vmatpush1.msra.mxu0 0.0
    %435 = vmatprep.subr.mxu0 0.0
    %436 = vmatpush1.msra.mxu0 0.0
    %437 = vmatprep.subr.mxu0 0.0
    %438 = vmatpush1.msra.mxu0 0.0
    %439 = vmatprep.subr.mxu0 0.0
    %440 = vmatpush1.msra.mxu0 0.0
    %441 = vmatprep.subr.mxu0 0.0
    %442 = vmatpush1.msra.mxu0 0.0
    %443 = vmatprep.subr.mxu0 0.0
    %444 = vmatpush1.msra.mxu0 0.0
    %445 = vmatprep.subr.mxu0 0.0
    %446 = vmatpush1.msra.mxu0 0.0
    %447 = vmatprep.subr.mxu0 0.0
    %448 = vmatpush1.msra.mxu0 0.0
    %449 = vmatprep.subr.mxu0 0.0
    %450 = vmatpush1.msra.mxu0 0.0
    %451 = vmatprep.subr.mxu0 0.0
    %452 = vmatpush1.msra.mxu0 0.0
    %453 = vmatprep.subr.mxu0 0.0
    %454 = vmatpush1.msra.mxu0 0.0
    %455 = vmatprep.subr.mxu0 0.0
    %456 = vmatpush1.msra.mxu0 0.0
    %457 = vmatprep.subr.mxu0 0.0
    %458 = vmatpush1.msra.mxu0 0.0
    %459 = vmatprep.subr.mxu0 0.0
    %460 = vmatpush1.msra.mxu0 0.0
    %461 = vmatprep.subr.mxu0 0.0
    %462 = vmatpush1.msra.mxu0 0.0
    %463 = vmatprep.subr.mxu0 0.0
    %464 = vmatpush1.msra.mxu0 0.0
    %465 = vmatprep.subr.mxu0 0.0
    %466 = vmatpush1.msra.mxu0 0.0
    %467 = vmatprep.subr.mxu0 0.0
    %468 = vmatpush1.msra.mxu0 0.0
    %469 = vmatprep.subr.mxu0 0.0
    %470 = vmatpush1.msra.mxu0 0.0
    %471 = vmatprep.subr.mxu0 0.0
    %472 = vmatpush1.msra.mxu0 0.0
    %473 = vmatprep.subr.mxu0 0.0
    %474 = vmatpush1.msra.mxu0 0.0
    %475 = vmatprep.subr.mxu0 0.0
    %476 = vmatpush1.msra.mxu0 0.0
    %477 = vmatprep.subr.mxu0 0.0
    %478 = vmatpush1.msra.mxu0 0.0
    %479 = vmatprep.subr.mxu0 0.0
    %480 = vmatpush1.msra.mxu0 0.0
    %481 = vmatprep.mubr.f32.mxu0 0.0
    %482 = vmatmul.mubr.f32.gmra.mrb[0].mxu0 %v412
    %v483 = vpop.f32.mrb[0].mxu0
    %v484 = vadd.f32 %v408, %v483
    %v485 = vpop.f32.mrb[0].mxu0
    %486 = vmatprep.mubr.f32.mxu0 0.0
    %487 = vmatmul.mubr.f32.gmra.mrb[0].mxu0 %v415
    %v488 = vpop.f32.mrb[0].mxu0
    %v489 = vadd.f32 %v408, %v488
    %v490 = vpop.f32.mrb[0].mxu0
    %491 = vdwg.mxu0
    %492 = vmatprep.subr.mxu0 0.0
    %493 = vmatpush1.msra.mxu0 %v484
    %494 = vmatprep.subr.mxu0 0.0
    %495 = vmatpush1.msra.mxu0 %v489
    %496 = vmatprep.subr.mxu0 0.0
    %497 = vmatpush1.msra.mxu0 0.0
    %498 = vmatprep.subr.mxu0 0.0
    %499 = vmatpush1.msra.mxu0 0.0
    %500 = vmatprep.subr.mxu0 0.0
    %501 = vmatpush1.msra.mxu0 0.0
    %502 = vmatprep.subr.mxu0 0.0
    %503 = vmatpush1.msra.mxu0 0.0
    %504 = vmatprep.subr.mxu0 0.0
    %505 = vmatpush1.msra.mxu0 0.0
    %506 = vmatprep.subr.mxu0 0.0
    %507 = vmatpush1.msra.mxu0 0.0
    %508 = vmatprep.subr.mxu0 0.0
    %509 = vmatpush1.msra.mxu0 0.0
    %510 = vmatprep.subr.mxu0 0.0
    %511 = vmatpush1.msra.mxu0 0.0
    %512 = vmatprep.subr.mxu0 0.0
    %513 = vmatpush1.msra.mxu0 0.0
    %514 = vmatprep.subr.mxu0 0.0
    %515 = vmatpush1.msra.mxu0 0.0
    %516 = vmatprep.subr.mxu0 0.0
    %517 = vmatpush1.msra.mxu0 0.0
    %518 = vmatprep.subr.mxu0 0.0
    %519 = vmatpush1.msra.mxu0 0.0
    %520 = vmatprep.subr.mxu0 0.0
    %521 = vmatpush1.msra.mxu0 0.0
    %522 = vmatprep.subr.mxu0 0.0
    %523 = vmatpush1.msra.mxu0 0.0
    %524 = vmatprep.subr.mxu0 0.0
    %525 = vmatpush1.msra.mxu0 0.0
    %526 = vmatprep.subr.mxu0 0.0
    %527 = vmatpush1.msra.mxu0 0.0
    %528 = vmatprep.subr.mxu0 0.0
    %529 = vmatpush1.msra.mxu0 0.0
    %530 = vmatprep.subr.mxu0 0.0
    %531 = vmatpush1.msra.mxu0 0.0
    %532 = vmatprep.subr.mxu0 0.0
    %533 = vmatpush1.msra.mxu0 0.0
    %534 = vmatprep.subr.mxu0 0.0
    %535 = vmatpush1.msra.mxu0 0.0
    %536 = vmatprep.subr.mxu0 0.0
    %537 = vmatpush1.msra.mxu0 0.0
    %538 = vmatprep.subr.mxu0 0.0
    %539 = vmatpush1.msra.mxu0 0.0
    %540 = vmatprep.subr.mxu0 0.0
    %541 = vmatpush1.msra.mxu0 0.0
    %542 = vmatprep.subr.mxu0 0.0
    %543 = vmatpush1.msra.mxu0 0.0
    %544 = vmatprep.subr.mxu0 0.0
    %545 = vmatpush1.msra.mxu0 0.0
    %546 = vmatprep.subr.mxu0 0.0
    %547 = vmatpush1.msra.mxu0 0.0
    %548 = vmatprep.subr.mxu0 0.0
    %549 = vmatpush1.msra.mxu0 0.0
    %550 = vmatprep.subr.mxu0 0.0
    %551 = vmatpush1.msra.mxu0 0.0
    %552 = vmatprep.subr.mxu0 0.0
    %553 = vmatpush1.msra.mxu0 0.0
    %554 = vmatprep.subr.mxu0 0.0
    %555 = vmatpush1.msra.mxu0 0.0
    %556 = vmatprep.mubr.f32.mxu0 0.0
    %557 = vmatmul.mubr.f32.gmra.mrb[0].mxu0 %v317
    %v558 = vpop.f32.mrb[0].mxu0
    %v559 = vadd.f32 0.0, %v558
    %v560 = vpop.f32.mrb[0].mxu0
    %561 = vmatprep.mubr.f32.mxu0 0.0
    %562 = vmatmul.mubr.f32.gmra.mrb[0].mxu0 %v320
    %v563 = vpop.f32.mrb[0].mxu0
    %v564 = vadd.f32 0.0, %v563
    %v565 = vpop.f32.mrb[0].mxu0
    %566 = vdwg.mxu0
    %v567 = vmax.f32 %v559, 0.0
    %v568 = vmax.f32 %v564, 0.0
    %v569 = vld [vmem:[#allocation5] sm:$0xff]
    %v570 = vld [vmem:[#allocation5 + $0x8] sm:$0xff]
    %572 = vset.pattern.permute.xlu0 0
    %573 = vperm.xlu0 %572, %v569
    %v574 = vpop.permute.xlu0 %573
    %577 = vset.pattern.permute.xlu0 0
    %578 = vperm.xlu0 %577, %v570
    %v579 = vpop.permute.xlu0 %578
    %v581 = vmul.f32 %v567, %v574
    %v582 = vmul.f32 %v568, %v579
    %v583 = vld [vmem:[%s7] sm:$0xff]
    %v584 = vld [vmem:[%s7 + $0x8] sm:$0xff]
    %v585 = vld [vmem:[%s7 + $0x10] sm:$0xff]
    %v586 = vld [vmem:[%s7 + $0x18] sm:$0xff]
    %v587 = vld [vmem:[#allocation10] sm:$0x1]
    %v589 = vlaneseq
    %v590 = vshrl.u32 %v589, 7
    %v591 = vsub.s32 0, %v590
    %v592 = vrot.slane %v587, %v591
    %v595 = vsel %vm410, %v567, 0
    %v598 = vsel %vm410, %v568, 0
    %600 = vmatprep.subr.mxu0 0.0
    %601 = vmatpush1.msra.mxu0 %v583
    %602 = vmatprep.subr.mxu0 0.0
    %603 = vmatpush1.msra.mxu0 %v584
    %604 = vmatprep.subr.mxu0 0.0
    %605 = vmatpush1.msra.mxu0 %v585
    %606 = vmatprep.subr.mxu0 0.0
    %607 = vmatpush1.msra.mxu0 %v586
    %608 = vmatprep.subr.mxu0 0.0
    %609 = vmatpush1.msra.mxu0 0.0
    %610 = vmatprep.subr.mxu0 0.0
    %611 = vmatpush1.msra.mxu0 0.0
    %612 = vmatprep.subr.mxu0 0.0
    %613 = vmatpush1.msra.mxu0 0.0
    %614 = vmatprep.subr.mxu0 0.0
    %615 = vmatpush1.msra.mxu0 0.0
    %616 = vmatprep.subr.mxu0 0.0
    %617 = vmatpush1.msra.mxu0 0.0
    %618 = vmatprep.subr.mxu0 0.0
    %619 = vmatpush1.msra.mxu0 0.0
    %620 = vmatprep.subr.mxu0 0.0
    %621 = vmatpush1.msra.mxu0 0.0
    %622 = vmatprep.subr.mxu0 0.0
    %623 = vmatpush1.msra.mxu0 0.0
    %624 = vmatprep.subr.mxu0 0.0
    %625 = vmatpush1.msra.mxu0 0.0
    %626 = vmatprep.subr.mxu0 0.0
    %627 = vmatpush1.msra.mxu0 0.0
    %628 = vmatprep.subr.mxu0 0.0
    %629 = vmatpush1.msra.mxu0 0.0
    %630 = vmatprep.subr.mxu0 0.0
    %631 = vmatpush1.msra.mxu0 0.0
    %632 = vmatprep.subr.mxu0 0.0
    %633 = vmatpush1.msra.mxu0 0.0
    %634 = vmatprep.subr.mxu0 0.0
    %635 = vmatpush1.msra.mxu0 0.0
    %636 = vmatprep.subr.mxu0 0.0
    %637 = vmatpush1.msra.mxu0 0.0
    %638 = vmatprep.subr.mxu0 0.0
    %639 = vmatpush1.msra.mxu0 0.0
    %640 = vmatprep.subr.mxu0 0.0
    %641 = vmatpush1.msra.mxu0 0.0
    %642 = vmatprep.subr.mxu0 0.0
    %643 = vmatpush1.msra.mxu0 0.0
    %644 = vmatprep.subr.mxu0 0.0
    %645 = vmatpush1.msra.mxu0 0.0
    %646 = vmatprep.subr.mxu0 0.0
    %647 = vmatpush1.msra.mxu0 0.0
    %648 = vmatprep.subr.mxu0 0.0
    %649 = vmatpush1.msra.mxu0 0.0
    %650 = vmatprep.subr.mxu0 0.0
    %651 = vmatpush1.msra.mxu0 0.0
    %652 = vmatprep.subr.mxu0 0.0
    %653 = vmatpush1.msra.mxu0 0.0
    %654 = vmatprep.subr.mxu0 0.0
    %655 = vmatpush1.msra.mxu0 0.0
    %656 = vmatprep.subr.mxu0 0.0
    %657 = vmatpush1.msra.mxu0 0.0
    %658 = vmatprep.subr.mxu0 0.0
    %659 = vmatpush1.msra.mxu0 0.0
    %660 = vmatprep.subr.mxu0 0.0
    %661 = vmatpush1.msra.mxu0 0.0
    %662 = vmatprep.subr.mxu0 0.0
    %663 = vmatpush1.msra.mxu0 0.0
    %664 = vmatprep.mubr.f32.mxu0 0.0
    %665 = vmatmul.mubr.f32.gmra.mrb[0].mxu0 %v595
    %v666 = vpop.f32.mrb[0].mxu0
    %v667 = vadd.f32 %v592, %v666
    %v668 = vpop.f32.mrb[0].mxu0
    %669 = vmatprep.mubr.f32.mxu0 0.0
    %670 = vmatmul.mubr.f32.gmra.mrb[0].mxu0 %v598
    %v671 = vpop.f32.mrb[0].mxu0
    %v672 = vadd.f32 %v592, %v671
    %v673 = vpop.f32.mrb[0].mxu0
    %674 = vdwg.mxu0
    %v675 = vsub.f32 0.0, %v667
    %v676 = vsub.f32 0.0, %v672
    %v677 = vmul.f32 %v675, 1.442695
    %v678 = vpow.pop %v677
    %v679 = vmul.f32 %v676, 1.442695
    %v680 = vpow.pop %v679
    %v681 = vadd.f32 %v678, 1.0
    %v682 = vadd.f32 %v680, 1.0
    %v683 = vrcp.pop %v681
    %v684 = vmul.f32 1.0, %v683
    %v685 = vrcp.pop %v682
    %v686 = vmul.f32 1.0, %v685
    %v687 = vtanh.pop %v667
    %v688 = vtanh.pop %v672
    %691 = vrot.lane.b32.xlu0 %v687, 64
    %v692 = vpop.permute.xlu0 %691
    %693 = vrot.lane.b32.xlu0 %v688, 64
    %v694 = vpop.permute.xlu0 %693
    %v697 = vmul.f32 %v684, %v692
    %v698 = vmul.f32 %v686, %v694
    %v699 = vtanh.pop %v697
    %v700 = vtanh.pop %v698
    %703 = vrot.lane.b32.xlu0 %v699, 96
    %v704 = vpop.permute.xlu0 %703
    %705 = vrot.lane.b32.xlu0 %v700, 96
    %v706 = vpop.permute.xlu0 %705
    %v709 = vmul.f32 %v684, %v704
    %v710 = vmul.f32 %v686, %v706
    %713 = vrot.lane.b32.xlu0 %v709, 32
    %v714 = vpop.permute.xlu0 %713
    %715 = vrot.lane.b32.xlu0 %v710, 32
    %v716 = vpop.permute.xlu0 %715
    %v719 = vadd.f32 %v581, %v714
    %v720 = vadd.f32 %v582, %v716
    %v721 = vld [vmem:[%s10] sm:$0xff]
    %v722 = vld [vmem:[%s10 + $0x8] sm:$0xff]
    %v723 = vld [vmem:[%s10 + $0x10] sm:$0xff]
    %v724 = vld [vmem:[%s10 + $0x18] sm:$0xff]
    %v725 = vld [vmem:[#allocation13] sm:$0x1]
    %v727 = vlaneseq
    %v728 = vshrl.u32 %v727, 7
    %v729 = vsub.s32 0, %v728
    %v730 = vrot.slane %v725, %v729
    %732 = vmatprep.subr.mxu0 0.0
    %733 = vmatpush1.msra.mxu0 %v721
    %734 = vmatprep.subr.mxu0 0.0
    %735 = vmatpush1.msra.mxu0 %v722
    %736 = vmatprep.subr.mxu0 0.0
    %737 = vmatpush1.msra.mxu0 %v723
    %738 = vmatprep.subr.mxu0 0.0
    %739 = vmatpush1.msra.mxu0 %v724
    %740 = vmatprep.subr.mxu0 0.0
    %741 = vmatpush1.msra.mxu0 0.0
    %742 = vmatprep.subr.mxu0 0.0
    %743 = vmatpush1.msra.mxu0 0.0
    %744 = vmatprep.subr.mxu0 0.0
    %745 = vmatpush1.msra.mxu0 0.0
    %746 = vmatprep.subr.mxu0 0.0
    %747 = vmatpush1.msra.mxu0 0.0
    %748 = vmatprep.subr.mxu0 0.0
    %749 = vmatpush1.msra.mxu0 0.0
    %750 = vmatprep.subr.mxu0 0.0
    %751 = vmatpush1.msra.mxu0 0.0
    %752 = vmatprep.subr.mxu0 0.0
    %753 = vmatpush1.msra.mxu0 0.0
    %754 = vmatprep.subr.mxu0 0.0
    %755 = vmatpush1.msra.mxu0 0.0
    %756 = vmatprep.subr.mxu0 0.0
    %757 = vmatpush1.msra.mxu0 0.0
    %758 = vmatprep.subr.mxu0 0.0
    %759 = vmatpush1.msra.mxu0 0.0
    %760 = vmatprep.subr.mxu0 0.0
    %761 = vmatpush1.msra.mxu0 0.0
    %762 = vmatprep.subr.mxu0 0.0
    %763 = vmatpush1.msra.mxu0 0.0
    %764 = vmatprep.subr.mxu0 0.0
    %765 = vmatpush1.msra.mxu0 0.0
    %766 = vmatprep.subr.mxu0 0.0
    %767 = vmatpush1.msra.mxu0 0.0
    %768 = vmatprep.subr.mxu0 0.0
    %769 = vmatpush1.msra.mxu0 0.0
    %770 = vmatprep.subr.mxu0 0.0
    %771 = vmatpush1.msra.mxu0 0.0
    %772 = vmatprep.subr.mxu0 0.0
    %773 = vmatpush1.msra.mxu0 0.0
    %774 = vmatprep.subr.mxu0 0.0
    %775 = vmatpush1.msra.mxu0 0.0
    %776 = vmatprep.subr.mxu0 0.0
    %777 = vmatpush1.msra.mxu0 0.0
    %778 = vmatprep.subr.mxu0 0.0
    %779 = vmatpush1.msra.mxu0 0.0
    %780 = vmatprep.subr.mxu0 0.0
    %781 = vmatpush1.msra.mxu0 0.0
    %782 = vmatprep.subr.mxu0 0.0
    %783 = vmatpush1.msra.mxu0 0.0
    %784 = vmatprep.subr.mxu0 0.0
    %785 = vmatpush1.msra.mxu0 0.0
    %786 = vmatprep.subr.mxu0 0.0
    %787 = vmatpush1.msra.mxu0 0.0
    %788 = vmatprep.subr.mxu0 0.0
    %789 = vmatpush1.msra.mxu0 0.0
    %790 = vmatprep.subr.mxu0 0.0
    %791 = vmatpush1.msra.mxu0 0.0
    %792 = vmatprep.subr.mxu0 0.0
    %793 = vmatpush1.msra.mxu0 0.0
    %794 = vmatprep.subr.mxu0 0.0
    %795 = vmatpush1.msra.mxu0 0.0
    %796 = vmatprep.mubr.f32.mxu0 0.0
    %797 = vmatmul.mubr.f32.gmra.mrb[0].mxu0 %v595
    %v798 = vpop.f32.mrb[0].mxu0
    %v799 = vadd.f32 %v730, %v798
    %v800 = vpop.f32.mrb[0].mxu0
    %801 = vmatprep.mubr.f32.mxu0 0.0
    %802 = vmatmul.mubr.f32.gmra.mrb[0].mxu0 %v598
    %v803 = vpop.f32.mrb[0].mxu0
    %v804 = vadd.f32 %v730, %v803
    %v805 = vpop.f32.mrb[0].mxu0
    %806 = vdwg.mxu0
    %v807 = vld [vmem:[#allocation11] sm:$0xff]
    %v808 = vld [vmem:[#allocation11 + $0x8] sm:$0xff]
    %v809 = vld [vmem:[#allocation11 + $0x10] sm:$0xff]
    %v810 = vld [vmem:[#allocation11 + $0x18] sm:$0xff]
    %v811 = vld [vmem:[%s18] sm:$0xff]
    %v813 = vsel %vm234, %v811, 0
    %815 = vmatprep.subr.mxu0 0.0
    %816 = vmatpush1.msra.mxu0 %v799
    %817 = vmatprep.subr.mxu0 0.0
    %818 = vmatpush1.msra.mxu0 %v804
    %819 = vmatprep.subr.mxu0 0.0
    %820 = vmatpush1.msra.mxu0 0.0
    %821 = vmatprep.subr.mxu0 0.0
    %822 = vmatpush1.msra.mxu0 0.0
    %823 = vmatprep.subr.mxu0 0.0
    %824 = vmatpush1.msra.mxu0 0.0
    %825 = vmatprep.subr.mxu0 0.0
    %826 = vmatpush1.msra.mxu0 0.0
    %827 = vmatprep.subr.mxu0 0.0
    %828 = vmatpush1.msra.mxu0 0.0
    %829 = vmatprep.subr.mxu0 0.0
    %830 = vmatpush1.msra.mxu0 0.0
    %831 = vmatprep.subr.mxu0 0.0
    %832 = vmatpush1.msra.mxu0 0.0
    %833 = vmatprep.subr.mxu0 0.0
    %834 = vmatpush1.msra.mxu0 0.0
    %835 = vmatprep.subr.mxu0 0.0
    %836 = vmatpush1.msra.mxu0 0.0
    %837 = vmatprep.subr.mxu0 0.0
    %838 = vmatpush1.msra.mxu0 0.0
    %839 = vmatprep.subr.mxu0 0.0
    %840 = vmatpush1.msra.mxu0 0.0
    %841 = vmatprep.subr.mxu0 0.0
    %842 = vmatpush1.msra.mxu0 0.0
    %843 = vmatprep.subr.mxu0 0.0
    %844 = vmatpush1.msra.mxu0 0.0
    %845 = vmatprep.subr.mxu0 0.0
    %846 = vmatpush1.msra.mxu0 0.0
    %847 = vmatprep.subr.mxu0 0.0
    %848 = vmatpush1.msra.mxu0 0.0
    %849 = vmatprep.subr.mxu0 0.0
    %850 = vmatpush1.msra.mxu0 0.0
    %851 = vmatprep.subr.mxu0 0.0
    %852 = vmatpush1.msra.mxu0 0.0
    %853 = vmatprep.subr.mxu0 0.0
    %854 = vmatpush1.msra.mxu0 0.0
    %855 = vmatprep.subr.mxu0 0.0
    %856 = vmatpush1.msra.mxu0 0.0
    %857 = vmatprep.subr.mxu0 0.0
    %858 = vmatpush1.msra.mxu0 0.0
    %859 = vmatprep.subr.mxu0 0.0
    %860 = vmatpush1.msra.mxu0 0.0
    %861 = vmatprep.subr.mxu0 0.0
    %862 = vmatpush1.msra.mxu0 0.0
    %863 = vmatprep.subr.mxu0 0.0
    %864 = vmatpush1.msra.mxu0 0.0
    %865 = vmatprep.subr.mxu0 0.0
    %866 = vmatpush1.msra.mxu0 0.0
    %867 = vmatprep.subr.mxu0 0.0
    %868 = vmatpush1.msra.mxu0 0.0
    %869 = vmatprep.subr.mxu0 0.0
    %870 = vmatpush1.msra.mxu0 0.0
    %871 = vmatprep.subr.mxu0 0.0
    %872 = vmatpush1.msra.mxu0 0.0
    %873 = vmatprep.subr.mxu0 0.0
    %874 = vmatpush1.msra.mxu0 0.0
    %875 = vmatprep.subr.mxu0 0.0
    %876 = vmatpush1.msra.mxu0 0.0
    %877 = vmatprep.subr.mxu0 0.0
    %878 = vmatpush1.msra.mxu0 0.0
    %879 = vmatprep.mubr.f32.mxu0 0.0
    %880 = vmatmul.mubr.f32.gmra.mrb[0].mxu0 %v813
    %v881 = vpop.f32.mrb[0].mxu0
    %v882 = vadd.f32 0.0, %v881
    %v883 = vpop.f32.mrb[0].mxu0
    %884 = vdwg.mxu0
    %v885 = vsub.f32 0.0, %v882
    %v886 = vmul.f32 %v885, 1.442695
    %v887 = vpow.pop %v886
    %v888 = vadd.f32 %v887, 1.0
    %v889 = vrcp.pop %v888
    %v890 = vmul.f32 1.0, %v889
    %v891 = vtanh.pop %v882
    %893 = vrot.lane.b32.xlu0 %v891, 64
    %v894 = vpop.permute.xlu0 %893
    %v896 = vmul.f32 %v890, %v894
    %v897 = vtanh.pop %v896
    %899 = vrot.lane.b32.xlu0 %v897, 96
    %v900 = vpop.permute.xlu0 %899
    %v902 = vmul.f32 %v890, %v900
    %s903 = scalar_lea.vmem %s18, 8
    %v904 = vld [vmem:[%s903] sm:$0xff]
    %906 = vrot.lane.b32.xlu0 %v902, 32
    %v907 = vpop.permute.xlu0 %906
    %v908 = vsel %vm410, %v907, 0
    %910 = vmatprep.subr.mxu0 0.0
    %911 = vmatpush1.msra.mxu0 %v807
    %912 = vmatprep.subr.mxu0 0.0
    %913 = vmatpush1.msra.mxu0 %v808
    %914 = vmatprep.subr.mxu0 0.0
    %915 = vmatpush1.msra.mxu0 %v809
    %916 = vmatprep.subr.mxu0 0.0
    %917 = vmatpush1.msra.mxu0 %v810
    %918 = vmatprep.subr.mxu0 0.0
    %919 = vmatpush1.msra.mxu0 0.0
    %920 = vmatprep.subr.mxu0 0.0
    %921 = vmatpush1.msra.mxu0 0.0
    %922 = vmatprep.subr.mxu0 0.0
    %923 = vmatpush1.msra.mxu0 0.0
    %924 = vmatprep.subr.mxu0 0.0
    %925 = vmatpush1.msra.mxu0 0.0
    %926 = vmatprep.subr.mxu0 0.0
    %927 = vmatpush1.msra.mxu0 0.0
    %928 = vmatprep.subr.mxu0 0.0
    %929 = vmatpush1.msra.mxu0 0.0
    %930 = vmatprep.subr.mxu0 0.0
    %931 = vmatpush1.msra.mxu0 0.0
    %932 = vmatprep.subr.mxu0 0.0
    %933 = vmatpush1.msra.mxu0 0.0
    %934 = vmatprep.subr.mxu0 0.0
    %935 = vmatpush1.msra.mxu0 0.0
    %936 = vmatprep.subr.mxu0 0.0
    %937 = vmatpush1.msra.mxu0 0.0
    %938 = vmatprep.subr.mxu0 0.0
    %939 = vmatpush1.msra.mxu0 0.0
    %940 = vmatprep.subr.mxu0 0.0
    %941 = vmatpush1.msra.mxu0 0.0
    %942 = vmatprep.subr.mxu0 0.0
    %943 = vmatpush1.msra.mxu0 0.0
    %944 = vmatprep.subr.mxu0 0.0
    %945 = vmatpush1.msra.mxu0 0.0
    %946 = vmatprep.subr.mxu0 0.0
    %947 = vmatpush1.msra.mxu0 0.0
    %948 = vmatprep.subr.mxu0 0.0
    %949 = vmatpush1.msra.mxu0 0.0
    %950 = vmatprep.subr.mxu0 0.0
    %951 = vmatpush1.msra.mxu0 0.0
    %952 = vmatprep.subr.mxu0 0.0
    %953 = vmatpush1.msra.mxu0 0.0
    %954 = vmatprep.subr.mxu0 0.0
    %955 = vmatpush1.msra.mxu0 0.0
    %956 = vmatprep.subr.mxu0 0.0
    %957 = vmatpush1.msra.mxu0 0.0
    %958 = vmatprep.subr.mxu0 0.0
    %959 = vmatpush1.msra.mxu0 0.0
    %960 = vmatprep.subr.mxu0 0.0
    %961 = vmatpush1.msra.mxu0 0.0
    %962 = vmatprep.subr.mxu0 0.0
    %963 = vmatpush1.msra.mxu0 0.0
    %964 = vmatprep.subr.mxu0 0.0
    %965 = vmatpush1.msra.mxu0 0.0
    %966 = vmatprep.subr.mxu0 0.0
    %967 = vmatpush1.msra.mxu0 0.0
    %968 = vmatprep.subr.mxu0 0.0
    %969 = vmatpush1.msra.mxu0 0.0
    %970 = vmatprep.subr.mxu0 0.0
    %971 = vmatpush1.msra.mxu0 0.0
    %972 = vmatprep.subr.mxu0 0.0
    %973 = vmatpush1.msra.mxu0 0.0
    %974 = vmatprep.mubr.f32.mxu0 0.0
    %975 = vmatmul.mubr.f32.gmra.mrb[0].mxu0 %v908
    %v976 = vpop.f32.mrb[0].mxu0
    %v977 = vadd.f32 0.0, %v976
    %v978 = vpop.f32.mrb[0].mxu0
    %979 = vdwg.mxu0
    %v981 = vsel %vm234, %v904, 0
    %983 = vmatprep.subr.mxu0 0.0
    %984 = vmatpush1.msra.mxu0 %v799
    %985 = vmatprep.subr.mxu0 0.0
    %986 = vmatpush1.msra.mxu0 %v804
    %987 = vmatprep.subr.mxu0 0.0
    %988 = vmatpush1.msra.mxu0 0.0
    %989 = vmatprep.subr.mxu0 0.0
    %990 = vmatpush1.msra.mxu0 0.0
    %991 = vmatprep.subr.mxu0 0.0
    %992 = vmatpush1.msra.mxu0 0.0
    %993 = vmatprep.subr.mxu0 0.0
    %994 = vmatpush1.msra.mxu0 0.0
    %995 = vmatprep.subr.mxu0 0.0
    %996 = vmatpush1.msra.mxu0 0.0
    %997 = vmatprep.subr.mxu0 0.0
    %998 = vmatpush1.msra.mxu0 0.0
    %999 = vmatprep.subr.mxu0 0.0
    %1000 = vmatpush1.msra.mxu0 0.0
    %1001 = vmatprep.subr.mxu0 0.0
    %1002 = vmatpush1.msra.mxu0 0.0
    %1003 = vmatprep.subr.mxu0 0.0
    %1004 = vmatpush1.msra.mxu0 0.0
    %1005 = vmatprep.subr.mxu0 0.0
    %1006 = vmatpush1.msra.mxu0 0.0
    %1007 = vmatprep.subr.mxu0 0.0
    %1008 = vmatpush1.msra.mxu0 0.0
    %1009 = vmatprep.subr.mxu0 0.0
    %1010 = vmatpush1.msra.mxu0 0.0
    %1011 = vmatprep.subr.mxu0 0.0
    %1012 = vmatpush1.msra.mxu0 0.0
    %1013 = vmatprep.subr.mxu0 0.0
    %1014 = vmatpush1.msra.mxu0 0.0
    %1015 = vmatprep.subr.mxu0 0.0
    %1016 = vmatpush1.msra.mxu0 0.0
    %1017 = vmatprep.subr.mxu0 0.0
    %1018 = vmatpush1.msra.mxu0 0.0
    %1019 = vmatprep.subr.mxu0 0.0
    %1020 = vmatpush1.msra.mxu0 0.0
    %1021 = vmatprep.subr.mxu0 0.0
    %1022 = vmatpush1.msra.mxu0 0.0
    %1023 = vmatprep.subr.mxu0 0.0
    %1024 = vmatpush1.msra.mxu0 0.0
    %1025 = vmatprep.subr.mxu0 0.0
    %1026 = vmatpush1.msra.mxu0 0.0
    %1027 = vmatprep.subr.mxu0 0.0
    %1028 = vmatpush1.msra.mxu0 0.0
    %1029 = vmatprep.subr.mxu0 0.0
    %1030 = vmatpush1.msra.mxu0 0.0
    %1031 = vmatprep.subr.mxu0 0.0
    %1032 = vmatpush1.msra.mxu0 0.0
    %1033 = vmatprep.subr.mxu0 0.0
    %1034 = vmatpush1.msra.mxu0 0.0
    %1035 = vmatprep.subr.mxu0 0.0
    %1036 = vmatpush1.msra.mxu0 0.0
    %1037 = vmatprep.subr.mxu0 0.0
    %1038 = vmatpush1.msra.mxu0 0.0
    %1039 = vmatprep.subr.mxu0 0.0
    %1040 = vmatpush1.msra.mxu0 0.0
    %1041 = vmatprep.subr.mxu0 0.0
    %1042 = vmatpush1.msra.mxu0 0.0
    %1043 = vmatprep.subr.mxu0 0.0
    %1044 = vmatpush1.msra.mxu0 0.0
    %1045 = vmatprep.subr.mxu0 0.0
    %1046 = vmatpush1.msra.mxu0 0.0
    %1047 = vmatprep.mubr.f32.mxu0 0.0
    %1048 = vmatmul.mubr.f32.gmra.mrb[0].mxu0 %v981
    %v1049 = vpop.f32.mrb[0].mxu0
    %v1050 = vadd.f32 %v977, %v1049
    %v1051 = vpop.f32.mrb[0].mxu0
    %1052 = vdwg.mxu0
    %v1053 = vsub.f32 0.0, %v1050
    %v1054 = vmul.f32 %v1053, 1.442695
    %v1055 = vpow.pop %v1054
    %v1056 = vadd.f32 %v1055, 1.0
    %v1057 = vrcp.pop %v1056
    %v1058 = vmul.f32 1.0, %v1057
    %v1059 = vtanh.pop %v1050
    %1061 = vrot.lane.b32.xlu0 %v896, 32
    %v1062 = vpop.permute.xlu0 %1061
    %v1064 = vmul.f32 %v1058, %v1062
    %1066 = vrot.lane.b32.xlu0 %v1059, 64
    %v1067 = vpop.permute.xlu0 %1066
    %v1069 = vmul.f32 %v1058, %v1067
    %1071 = vrot.lane.b32.xlu0 %v1069, 32
    %v1072 = vpop.permute.xlu0 %1071
    %v1074 = vadd.f32 %v1064, %v1072
    %v1075 = vtanh.pop %v1074
    %1077 = vrot.lane.b32.xlu0 %v1075, 64
    %v1078 = vpop.permute.xlu0 %1077
    %v1080 = vmul.f32 %v1058, %v1078
    %v1081 = vld [vmem:[#allocation19] sm:$0xff]
    %v1082 = vld [vmem:[#allocation19 + $0x8] sm:$0xff]
    %1084 = vrot.lane.b32.xlu0 %v1080, 32
    %v1085 = vpop.permute.xlu0 %1084
    %vm1087 = vcmask 64512
    %v1089 = vsel %vm1087, %v1081, 0
    %v1092 = vsel %vm1087, %v1082, 0
    %1094 = vmatprep.subr.mxu0 0.0
    %1095 = vmatpush1.msra.mxu0 %v1085
    %1096 = vmatprep.subr.mxu0 0.0
    %1097 = vmatpush1.msra.mxu0 0.0
    %1098 = vmatprep.subr.mxu0 0.0
    %1099 = vmatpush1.msra.mxu0 0.0
    %1100 = vmatprep.subr.mxu0 0.0
    %1101 = vmatpush1.msra.mxu0 0.0
    %1102 = vmatprep.subr.mxu0 0.0
    %1103 = vmatpush1.msra.mxu0 0.0
    %1104 = vmatprep.subr.mxu0 0.0
    %1105 = vmatpush1.msra.mxu0 0.0
    %1106 = vmatprep.subr.mxu0 0.0
    %1107 = vmatpush1.msra.mxu0 0.0
    %1108 = vmatprep.subr.mxu0 0.0
    %1109 = vmatpush1.msra.mxu0 0.0
    %1110 = vmatprep.subr.mxu0 0.0
    %1111 = vmatpush1.msra.mxu0 0.0
    %1112 = vmatprep.subr.mxu0 0.0
    %1113 = vmatpush1.msra.mxu0 0.0
    %1114 = vmatprep.subr.mxu0 0.0
    %1115 = vmatpush1.msra.mxu0 0.0
    %1116 = vmatprep.subr.mxu0 0.0
    %1117 = vmatpush1.msra.mxu0 0.0
    %1118 = vmatprep.subr.mxu0 0.0
    %1119 = vmatpush1.msra.mxu0 0.0
    %1120 = vmatprep.subr.mxu0 0.0
    %1121 = vmatpush1.msra.mxu0 0.0
    %1122 = vmatprep.subr.mxu0 0.0
    %1123 = vmatpush1.msra.mxu0 0.0
    %1124 = vmatprep.subr.mxu0 0.0
    %1125 = vmatpush1.msra.mxu0 0.0
    %1126 = vmatprep.subr.mxu0 0.0
    %1127 = vmatpush1.msra.mxu0 0.0
    %1128 = vmatprep.subr.mxu0 0.0
    %1129 = vmatpush1.msra.mxu0 0.0
    %1130 = vmatprep.subr.mxu0 0.0
    %1131 = vmatpush1.msra.mxu0 0.0
    %1132 = vmatprep.subr.mxu0 0.0
    %1133 = vmatpush1.msra.mxu0 0.0
    %1134 = vmatprep.subr.mxu0 0.0
    %1135 = vmatpush1.msra.mxu0 0.0
    %1136 = vmatprep.subr.mxu0 0.0
    %1137 = vmatpush1.msra.mxu0 0.0
    %1138 = vmatprep.subr.mxu0 0.0
    %1139 = vmatpush1.msra.mxu0 0.0
    %1140 = vmatprep.subr.mxu0 0.0
    %1141 = vmatpush1.msra.mxu0 0.0
    %1142 = vmatprep.subr.mxu0 0.0
    %1143 = vmatpush1.msra.mxu0 0.0
    %1144 = vmatprep.subr.mxu0 0.0
    %1145 = vmatpush1.msra.mxu0 0.0
    %1146 = vmatprep.subr.mxu0 0.0
    %1147 = vmatpush1.msra.mxu0 0.0
    %1148 = vmatprep.subr.mxu0 0.0
    %1149 = vmatpush1.msra.mxu0 0.0
    %1150 = vmatprep.subr.mxu0 0.0
    %1151 = vmatpush1.msra.mxu0 0.0
    %1152 = vmatprep.subr.mxu0 0.0
    %1153 = vmatpush1.msra.mxu0 0.0
    %1154 = vmatprep.subr.mxu0 0.0
    %1155 = vmatpush1.msra.mxu0 0.0
    %1156 = vmatprep.subr.mxu0 0.0
    %1157 = vmatpush1.msra.mxu0 0.0
    %1158 = vmatprep.mubr.f32.mxu0 0.0
    %1159 = vmatmul.mubr.f32.gmra.mrb[0].mxu0 %v1089
    %v1160 = vpop.f32.mrb[0].mxu0
    %v1161 = vadd.f32 0.0, %v1160
    %v1162 = vpop.f32.mrb[0].mxu0
    %1163 = vmatprep.mubr.f32.mxu0 0.0
    %1164 = vmatmul.mubr.f32.gmra.mrb[0].mxu0 %v1092
    %v1165 = vpop.f32.mrb[0].mxu0
    %v1166 = vadd.f32 0.0, %v1165
    %v1167 = vpop.f32.mrb[0].mxu0
    %1168 = vdwg.mxu0
    %v1169 = vadd.f32 %v719, %v1161
    %v1170 = vadd.f32 %v720, %v1166
    %v1171 = vld [vmem:[#allocation14] sm:$0xff]
    %v1172 = vld [vmem:[#allocation14 + $0x8] sm:$0xff]
    %v1173 = vld [vmem:[#allocation14 + $0x10] sm:$0xff]
    %v1174 = vld [vmem:[#allocation14 + $0x18] sm:$0xff]
    %v1175 = vld [vmem:[#allocation17] sm:$0x1]
    %v1177 = vlaneseq
    %v1178 = vshrl.u32 %v1177, 7
    %v1179 = vsub.s32 0, %v1178
    %v1180 = vrot.slane %v1175, %v1179
    %1182 = vmatprep.subr.mxu0 0.0
    %1183 = vmatpush1.msra.mxu0 %v1171
    %1184 = vmatprep.subr.mxu0 0.0
    %1185 = vmatpush1.msra.mxu0 %v1172
    %1186 = vmatprep.subr.mxu0 0.0
    %1187 = vmatpush1.msra.mxu0 %v1173
    %1188 = vmatprep.subr.mxu0 0.0
    %1189 = vmatpush1.msra.mxu0 %v1174
    %1190 = vmatprep.subr.mxu0 0.0
    %1191 = vmatpush1.msra.mxu0 0.0
    %1192 = vmatprep.subr.mxu0 0.0
    %1193 = vmatpush1.msra.mxu0 0.0
    %1194 = vmatprep.subr.mxu0 0.0
    %1195 = vmatpush1.msra.mxu0 0.0
    %1196 = vmatprep.subr.mxu0 0.0
    %1197 = vmatpush1.msra.mxu0 0.0
    %1198 = vmatprep.subr.mxu0 0.0
    %1199 = vmatpush1.msra.mxu0 0.0
    %1200 = vmatprep.subr.mxu0 0.0
    %1201 = vmatpush1.msra.mxu0 0.0
    %1202 = vmatprep.subr.mxu0 0.0
    %1203 = vmatpush1.msra.mxu0 0.0
    %1204 = vmatprep.subr.mxu0 0.0
    %1205 = vmatpush1.msra.mxu0 0.0
    %1206 = vmatprep.subr.mxu0 0.0
    %1207 = vmatpush1.msra.mxu0 0.0
    %1208 = vmatprep.subr.mxu0 0.0
    %1209 = vmatpush1.msra.mxu0 0.0
    %1210 = vmatprep.subr.mxu0 0.0
    %1211 = vmatpush1.msra.mxu0 0.0
    %1212 = vmatprep.subr.mxu0 0.0
    %1213 = vmatpush1.msra.mxu0 0.0
    %1214 = vmatprep.subr.mxu0 0.0
    %1215 = vmatpush1.msra.mxu0 0.0
    %1216 = vmatprep.subr.mxu0 0.0
    %1217 = vmatpush1.msra.mxu0 0.0
    %1218 = vmatprep.subr.mxu0 0.0
    %1219 = vmatpush1.msra.mxu0 0.0
    %1220 = vmatprep.subr.mxu0 0.0
    %1221 = vmatpush1.msra.mxu0 0.0
    %1222 = vmatprep.subr.mxu0 0.0
    %1223 = vmatpush1.msra.mxu0 0.0
    %1224 = vmatprep.subr.mxu0 0.0
    %1225 = vmatpush1.msra.mxu0 0.0
    %1226 = vmatprep.subr.mxu0 0.0
    %1227 = vmatpush1.msra.mxu0 0.0
    %1228 = vmatprep.subr.mxu0 0.0
    %1229 = vmatpush1.msra.mxu0 0.0
    %1230 = vmatprep.subr.mxu0 0.0
    %1231 = vmatpush1.msra.mxu0 0.0
    %1232 = vmatprep.subr.mxu0 0.0
    %1233 = vmatpush1.msra.mxu0 0.0
    %1234 = vmatprep.subr.mxu0 0.0
    %1235 = vmatpush1.msra.mxu0 0.0
    %1236 = vmatprep.subr.mxu0 0.0
    %1237 = vmatpush1.msra.mxu0 0.0
    %1238 = vmatprep.subr.mxu0 0.0
    %1239 = vmatpush1.msra.mxu0 0.0
    %1240 = vmatprep.subr.mxu0 0.0
    %1241 = vmatpush1.msra.mxu0 0.0
    %1242 = vmatprep.subr.mxu0 0.0
    %1243 = vmatpush1.msra.mxu0 0.0
    %1244 = vmatprep.subr.mxu0 0.0
    %1245 = vmatpush1.msra.mxu0 0.0
    %1246 = vmatprep.mubr.f32.mxu0 0.0
    %1247 = vmatmul.mubr.f32.gmra.mrb[0].mxu0 %v595
    %v1248 = vpop.f32.mrb[0].mxu0
    %v1249 = vadd.f32 %v1180, %v1248
    %v1250 = vpop.f32.mrb[0].mxu0
    %1251 = vmatprep.mubr.f32.mxu0 0.0
    %1252 = vmatmul.mubr.f32.gmra.mrb[0].mxu0 %v598
    %v1253 = vpop.f32.mrb[0].mxu0
    %v1254 = vadd.f32 %v1180, %v1253
    %v1255 = vpop.f32.mrb[0].mxu0
    %1256 = vdwg.mxu0
    %v1257 = vld [vmem:[#allocation16] sm:$0xff]
    %v1258 = vld [vmem:[#allocation16 + $0x8] sm:$0xff]
    %v1259 = vld [vmem:[#allocation16 + $0x10] sm:$0xff]
    %v1260 = vld [vmem:[#allocation16 + $0x18] sm:$0xff]
    %v1261 = vld [vmem:[#allocation20] sm:$0xf]
    %v1263 = vsel %vm234, %v1261, 0
    %1265 = vmatprep.subr.mxu0 0.0
    %1266 = vmatpush1.msra.mxu0 %v1249
    %1267 = vmatprep.subr.mxu0 0.0
    %1268 = vmatpush1.msra.mxu0 %v1254
    %1269 = vmatprep.subr.mxu0 0.0
    %1270 = vmatpush1.msra.mxu0 0.0
    %1271 = vmatprep.subr.mxu0 0.0
    %1272 = vmatpush1.msra.mxu0 0.0
    %1273 = vmatprep.subr.mxu0 0.0
    %1274 = vmatpush1.msra.mxu0 0.0
    %1275 = vmatprep.subr.mxu0 0.0
    %1276 = vmatpush1.msra.mxu0 0.0
    %1277 = vmatprep.subr.mxu0 0.0
    %1278 = vmatpush1.msra.mxu0 0.0
    %1279 = vmatprep.subr.mxu0 0.0
    %1280 = vmatpush1.msra.mxu0 0.0
    %1281 = vmatprep.subr.mxu0 0.0
    %1282 = vmatpush1.msra.mxu0 0.0
    %1283 = vmatprep.subr.mxu0 0.0
    %1284 = vmatpush1.msra.mxu0 0.0
    %1285 = vmatprep.subr.mxu0 0.0
    %1286 = vmatpush1.msra.mxu0 0.0
    %1287 = vmatprep.subr.mxu0 0.0
    %1288 = vmatpush1.msra.mxu0 0.0
    %1289 = vmatprep.subr.mxu0 0.0
    %1290 = vmatpush1.msra.mxu0 0.0
    %1291 = vmatprep.subr.mxu0 0.0
    %1292 = vmatpush1.msra.mxu0 0.0
    %1293 = vmatprep.subr.mxu0 0.0
    %1294 = vmatpush1.msra.mxu0 0.0
    %1295 = vmatprep.subr.mxu0 0.0
    %1296 = vmatpush1.msra.mxu0 0.0
    %1297 = vmatprep.subr.mxu0 0.0
    %1298 = vmatpush1.msra.mxu0 0.0
    %1299 = vmatprep.subr.mxu0 0.0
    %1300 = vmatpush1.msra.mxu0 0.0
    %1301 = vmatprep.subr.mxu0 0.0
    %1302 = vmatpush1.msra.mxu0 0.0
    %1303 = vmatprep.subr.mxu0 0.0
    %1304 = vmatpush1.msra.mxu0 0.0
    %1305 = vmatprep.subr.mxu0 0.0
    %1306 = vmatpush1.msra.mxu0 0.0
    %1307 = vmatprep.subr.mxu0 0.0
    %1308 = vmatpush1.msra.mxu0 0.0
    %1309 = vmatprep.subr.mxu0 0.0
    %1310 = vmatpush1.msra.mxu0 0.0
    %1311 = vmatprep.subr.mxu0 0.0
    %1312 = vmatpush1.msra.mxu0 0.0
    %1313 = vmatprep.subr.mxu0 0.0
    %1314 = vmatpush1.msra.mxu0 0.0
    %1315 = vmatprep.subr.mxu0 0.0
    %1316 = vmatpush1.msra.mxu0 0.0
    %1317 = vmatprep.subr.mxu0 0.0
    %1318 = vmatpush1.msra.mxu0 0.0
    %1319 = vmatprep.subr.mxu0 0.0
    %1320 = vmatpush1.msra.mxu0 0.0
    %1321 = vmatprep.subr.mxu0 0.0
    %1322 = vmatpush1.msra.mxu0 0.0
    %1323 = vmatprep.subr.mxu0 0.0
    %1324 = vmatpush1.msra.mxu0 0.0
    %1325 = vmatprep.subr.mxu0 0.0
    %1326 = vmatpush1.msra.mxu0 0.0
    %1327 = vmatprep.subr.mxu0 0.0
    %1328 = vmatpush1.msra.mxu0 0.0
    %1329 = vmatprep.mubr.f32.mxu0 0.0
    %1330 = vmatmul.mubr.f32.gmra.mrb[0].mxu0 %v1263
    %v1331 = vpop.f32.mrb[0].mxu0
    %v1332 = vadd.f32 0.0, %v1331
    %v1333 = vpop.f32.mrb[0].mxu0
    %1334 = vdwg.mxu0
    %v1335 = vsub.f32 0.0, %v1332
    %v1336 = vmul.f32 %v1335, 1.442695
    %v1337 = vpow.pop %v1336
    %v1338 = vadd.f32 %v1337, 1.0
    %v1339 = vrcp.pop %v1338
    %v1340 = vmul.f32 1.0, %v1339
    %v1341 = vtanh.pop %v1332
    %1343 = vrot.lane.b32.xlu0 %v1341, 64
    %v1344 = vpop.permute.xlu0 %1343
    %v1346 = vmul.f32 %v1340, %v1344
    %v1347 = vtanh.pop %v1346
    %1349 = vrot.lane.b32.xlu0 %v1347, 96
    %v1350 = vpop.permute.xlu0 %1349
    %v1352 = vmul.f32 %v1340, %v1350
    %s1353 = scalar_lea.vmem [#allocation20], 4
    %v1354 = vld [vmem:[%s1353] sm:$0xf]
    %1356 = vrot.lane.b32.xlu0 %v1352, 32
    %v1357 = vpop.permute.xlu0 %1356
    %v1358 = vsel %vm410, %v1357, 0
    %1360 = vmatprep.subr.mxu0 0.0
    %1361 = vmatpush1.msra.mxu0 %v1257
    %1362 = vmatprep.subr.mxu0 0.0
    %1363 = vmatpush1.msra.mxu0 %v1258
    %1364 = vmatprep.subr.mxu0 0.0
    %1365 = vmatpush1.msra.mxu0 %v1259
    %1366 = vmatprep.subr.mxu0 0.0
    %1367 = vmatpush1.msra.mxu0 %v1260
    %1368 = vmatprep.subr.mxu0 0.0
    %1369 = vmatpush1.msra.mxu0 0.0
    %1370 = vmatprep.subr.mxu0 0.0
    %1371 = vmatpush1.msra.mxu0 0.0
    %1372 = vmatprep.subr.mxu0 0.0
    %1373 = vmatpush1.msra.mxu0 0.0
    %1374 = vmatprep.subr.mxu0 0.0
    %1375 = vmatpush1.msra.mxu0 0.0
    %1376 = vmatprep.subr.mxu0 0.0
    %1377 = vmatpush1.msra.mxu0 0.0
    %1378 = vmatprep.subr.mxu0 0.0
    %1379 = vmatpush1.msra.mxu0 0.0
    %1380 = vmatprep.subr.mxu0 0.0
    %1381 = vmatpush1.msra.mxu0 0.0
    %1382 = vmatprep.subr.mxu0 0.0
    %1383 = vmatpush1.msra.mxu0 0.0
    %1384 = vmatprep.subr.mxu0 0.0
    %1385 = vmatpush1.msra.mxu0 0.0
    %1386 = vmatprep.subr.mxu0 0.0
    %1387 = vmatpush1.msra.mxu0 0.0
    %1388 = vmatprep.subr.mxu0 0.0
    %1389 = vmatpush1.msra.mxu0 0.0
    %1390 = vmatprep.subr.mxu0 0.0
    %1391 = vmatpush1.msra.mxu0 0.0
    %1392 = vmatprep.subr.mxu0 0.0
    %1393 = vmatpush1.msra.mxu0 0.0
    %1394 = vmatprep.subr.mxu0 0.0
    %1395 = vmatpush1.msra.mxu0 0.0
    %1396 = vmatprep.subr.mxu0 0.0
    %1397 = vmatpush1.msra.mxu0 0.0
    %1398 = vmatprep.subr.mxu0 0.0
    %1399 = vmatpush1.msra.mxu0 0.0
    %1400 = vmatprep.subr.mxu0 0.0
    %1401 = vmatpush1.msra.mxu0 0.0
    %1402 = vmatprep.subr.mxu0 0.0
    %1403 = vmatpush1.msra.mxu0 0.0
    %1404 = vmatprep.subr.mxu0 0.0
    %1405 = vmatpush1.msra.mxu0 0.0
    %1406 = vmatprep.subr.mxu0 0.0
    %1407 = vmatpush1.msra.mxu0 0.0
    %1408 = vmatprep.subr.mxu0 0.0
    %1409 = vmatpush1.msra.mxu0 0.0
    %1410 = vmatprep.subr.mxu0 0.0
    %1411 = vmatpush1.msra.mxu0 0.0
    %1412 = vmatprep.subr.mxu0 0.0
    %1413 = vmatpush1.msra.mxu0 0.0
    %1414 = vmatprep.subr.mxu0 0.0
    %1415 = vmatpush1.msra.mxu0 0.0
    %1416 = vmatprep.subr.mxu0 0.0
    %1417 = vmatpush1.msra.mxu0 0.0
    %1418 = vmatprep.subr.mxu0 0.0
    %1419 = vmatpush1.msra.mxu0 0.0
    %1420 = vmatprep.subr.mxu0 0.0
    %1421 = vmatpush1.msra.mxu0 0.0
    %1422 = vmatprep.subr.mxu0 0.0
    %1423 = vmatpush1.msra.mxu0 0.0
    %1424 = vmatprep.mubr.f32.mxu0 0.0
    %1425 = vmatmul.mubr.f32.gmra.mrb[0].mxu0 %v1358
    %v1426 = vpop.f32.mrb[0].mxu0
    %v1427 = vadd.f32 0.0, %v1426
    %v1428 = vpop.f32.mrb[0].mxu0
    %1429 = vdwg.mxu0
    %v1431 = vsel %vm234, %v1354, 0
    %1433 = vmatprep.subr.mxu0 0.0
    %1434 = vmatpush1.msra.mxu0 %v1249
    %1435 = vmatprep.subr.mxu0 0.0
    %1436 = vmatpush1.msra.mxu0 %v1254
    %1437 = vmatprep.subr.mxu0 0.0
    %1438 = vmatpush1.msra.mxu0 0.0
    %1439 = vmatprep.subr.mxu0 0.0
    %1440 = vmatpush1.msra.mxu0 0.0
    %1441 = vmatprep.subr.mxu0 0.0
    %1442 = vmatpush1.msra.mxu0 0.0
    %1443 = vmatprep.subr.mxu0 0.0
    %1444 = vmatpush1.msra.mxu0 0.0
    %1445 = vmatprep.subr.mxu0 0.0
    %1446 = vmatpush1.msra.mxu0 0.0
    %1447 = vmatprep.subr.mxu0 0.0
    %1448 = vmatpush1.msra.mxu0 0.0
    %1449 = vmatprep.subr.mxu0 0.0
    %1450 = vmatpush1.msra.mxu0 0.0
    %1451 = vmatprep.subr.mxu0 0.0
    %1452 = vmatpush1.msra.mxu0 0.0
    %1453 = vmatprep.subr.mxu0 0.0
    %1454 = vmatpush1.msra.mxu0 0.0
    %1455 = vmatprep.subr.mxu0 0.0
    %1456 = vmatpush1.msra.mxu0 0.0
    %1457 = vmatprep.subr.mxu0 0.0
    %1458 = vmatpush1.msra.mxu0 0.0
    %1459 = vmatprep.subr.mxu0 0.0
    %1460 = vmatpush1.msra.mxu0 0.0
    %1461 = vmatprep.subr.mxu0 0.0
    %1462 = vmatpush1.msra.mxu0 0.0
    %1463 = vmatprep.subr.mxu0 0.0
    %1464 = vmatpush1.msra.mxu0 0.0
    %1465 = vmatprep.subr.mxu0 0.0
    %1466 = vmatpush1.msra.mxu0 0.0
    %1467 = vmatprep.subr.mxu0 0.0
    %1468 = vmatpush1.msra.mxu0 0.0
    %1469 = vmatprep.subr.mxu0 0.0
    %1470 = vmatpush1.msra.mxu0 0.0
    %1471 = vmatprep.subr.mxu0 0.0
    %1472 = vmatpush1.msra.mxu0 0.0
    %1473 = vmatprep.subr.mxu0 0.0
    %1474 = vmatpush1.msra.mxu0 0.0
    %1475 = vmatprep.subr.mxu0 0.0
    %1476 = vmatpush1.msra.mxu0 0.0
    %1477 = vmatprep.subr.mxu0 0.0
    %1478 = vmatpush1.msra.mxu0 0.0
    %1479 = vmatprep.subr.mxu0 0.0
    %1480 = vmatpush1.msra.mxu0 0.0
    %1481 = vmatprep.subr.mxu0 0.0
    %1482 = vmatpush1.msra.mxu0 0.0
    %1483 = vmatprep.subr.mxu0 0.0
    %1484 = vmatpush1.msra.mxu0 0.0
    %1485 = vmatprep.subr.mxu0 0.0
    %1486 = vmatpush1.msra.mxu0 0.0
    %1487 = vmatprep.subr.mxu0 0.0
    %1488 = vmatpush1.msra.mxu0 0.0
    %1489 = vmatprep.subr.mxu0 0.0
    %1490 = vmatpush1.msra.mxu0 0.0
    %1491 = vmatprep.subr.mxu0 0.0
    %1492 = vmatpush1.msra.mxu0 0.0
    %1493 = vmatprep.subr.mxu0 0.0
    %1494 = vmatpush1.msra.mxu0 0.0
    %1495 = vmatprep.subr.mxu0 0.0
    %1496 = vmatpush1.msra.mxu0 0.0
    %1497 = vmatprep.mubr.f32.mxu0 0.0
    %1498 = vmatmul.mubr.f32.gmra.mrb[0].mxu0 %v1431
    %v1499 = vpop.f32.mrb[0].mxu0
    %v1500 = vadd.f32 %v1427, %v1499
    %v1501 = vpop.f32.mrb[0].mxu0
    %1502 = vdwg.mxu0
    %v1503 = vsub.f32 0.0, %v1500
    %v1504 = vmul.f32 %v1503, 1.442695
    %v1505 = vpow.pop %v1504
    %v1506 = vadd.f32 %v1505, 1.0
    %v1507 = vrcp.pop %v1506
    %v1508 = vmul.f32 1.0, %v1507
    %v1509 = vtanh.pop %v1500
    %1511 = vrot.lane.b32.xlu0 %v1346, 32
    %v1512 = vpop.permute.xlu0 %1511
    %v1514 = vmul.f32 %v1508, %v1512
    %1516 = vrot.lane.b32.xlu0 %v1509, 64
    %v1517 = vpop.permute.xlu0 %1516
    %v1519 = vmul.f32 %v1508, %v1517
    %1521 = vrot.lane.b32.xlu0 %v1519, 32
    %v1522 = vpop.permute.xlu0 %1521
    %v1524 = vadd.f32 %v1514, %v1522
    %v1525 = vtanh.pop %v1524
    %1527 = vrot.lane.b32.xlu0 %v1525, 64
    %v1528 = vpop.permute.xlu0 %1527
    %v1530 = vmul.f32 %v1508, %v1528
    %s1531 = scalar_lea.vmem [#allocation20], 8
    %v1532 = vld [vmem:[%s1531] sm:$0xf]
    %1534 = vrot.lane.b32.xlu0 %v1530, 32
    %v1535 = vpop.permute.xlu0 %1534
    %v1536 = vsel %vm410, %v1535, 0
    %1538 = vmatprep.subr.mxu0 0.0
    %1539 = vmatpush1.msra.mxu0 %v1257
    %1540 = vmatprep.subr.mxu0 0.0
    %1541 = vmatpush1.msra.mxu0 %v1258
    %1542 = vmatprep.subr.mxu0 0.0
    %1543 = vmatpush1.msra.mxu0 %v1259
    %1544 = vmatprep.subr.mxu0 0.0
    %1545 = vmatpush1.msra.mxu0 %v1260
    %1546 = vmatprep.subr.mxu0 0.0
    %1547 = vmatpush1.msra.mxu0 0.0
    %1548 = vmatprep.subr.mxu0 0.0
    %1549 = vmatpush1.msra.mxu0 0.0
    %1550 = vmatprep.subr.mxu0 0.0
    %1551 = vmatpush1.msra.mxu0 0.0
    %1552 = vmatprep.subr.mxu0 0.0
    %1553 = vmatpush1.msra.mxu0 0.0
    %1554 = vmatprep.subr.mxu0 0.0
    %1555 = vmatpush1.msra.mxu0 0.0
    %1556 = vmatprep.subr.mxu0 0.0
    %1557 = vmatpush1.msra.mxu0 0.0
    %1558 = vmatprep.subr.mxu0 0.0
    %1559 = vmatpush1.msra.mxu0 0.0
    %1560 = vmatprep.subr.mxu0 0.0
    %1561 = vmatpush1.msra.mxu0 0.0
    %1562 = vmatprep.subr.mxu0 0.0
    %1563 = vmatpush1.msra.mxu0 0.0
    %1564 = vmatprep.subr.mxu0 0.0
    %1565 = vmatpush1.msra.mxu0 0.0
    %1566 = vmatprep.subr.mxu0 0.0
    %1567 = vmatpush1.msra.mxu0 0.0
    %1568 = vmatprep.subr.mxu0 0.0
    %1569 = vmatpush1.msra.mxu0 0.0
    %1570 = vmatprep.subr.mxu0 0.0
    %1571 = vmatpush1.msra.mxu0 0.0
    %1572 = vmatprep.subr.mxu0 0.0
    %1573 = vmatpush1.msra.mxu0 0.0
    %1574 = vmatprep.subr.mxu0 0.0
    %1575 = vmatpush1.msra.mxu0 0.0
    %1576 = vmatprep.subr.mxu0 0.0
    %1577 = vmatpush1.msra.mxu0 0.0
    %1578 = vmatprep.subr.mxu0 0.0
    %1579 = vmatpush1.msra.mxu0 0.0
    %1580 = vmatprep.subr.mxu0 0.0
    %1581 = vmatpush1.msra.mxu0 0.0
    %1582 = vmatprep.subr.mxu0 0.0
    %1583 = vmatpush1.msra.mxu0 0.0
    %1584 = vmatprep.subr.mxu0 0.0
    %1585 = vmatpush1.msra.mxu0 0.0
    %1586 = vmatprep.subr.mxu0 0.0
    %1587 = vmatpush1.msra.mxu0 0.0
    %1588 = vmatprep.subr.mxu0 0.0
    %1589 = vmatpush1.msra.mxu0 0.0
    %1590 = vmatprep.subr.mxu0 0.0
    %1591 = vmatpush1.msra.mxu0 0.0
    %1592 = vmatprep.subr.mxu0 0.0
    %1593 = vmatpush1.msra.mxu0 0.0
    %1594 = vmatprep.subr.mxu0 0.0
    %1595 = vmatpush1.msra.mxu0 0.0
    %1596 = vmatprep.subr.mxu0 0.0
    %1597 = vmatpush1.msra.mxu0 0.0
    %1598 = vmatprep.subr.mxu0 0.0
    %1599 = vmatpush1.msra.mxu0 0.0
    %1600 = vmatprep.subr.mxu0 0.0
    %1601 = vmatpush1.msra.mxu0 0.0
    %1602 = vmatprep.mubr.f32.mxu0 0.0
    %1603 = vmatmul.mubr.f32.gmra.mrb[0].mxu0 %v1536
    %v1604 = vpop.f32.mrb[0].mxu0
    %v1605 = vadd.f32 0.0, %v1604
    %v1606 = vpop.f32.mrb[0].mxu0
    %1607 = vdwg.mxu0
    %v1609 = vsel %vm234, %v1532, 0
    %1611 = vmatprep.subr.mxu0 0.0
    %1612 = vmatpush1.msra.mxu0 %v1249
    %1613 = vmatprep.subr.mxu0 0.0
    %1614 = vmatpush1.msra.mxu0 %v1254
    %1615 = vmatprep.subr.mxu0 0.0
    %1616 = vmatpush1.msra.mxu0 0.0
    %1617 = vmatprep.subr.mxu0 0.0
    %1618 = vmatpush1.msra.mxu0 0.0
    %1619 = vmatprep.subr.mxu0 0.0
    %1620 = vmatpush1.msra.mxu0 0.0
    %1621 = vmatprep.subr.mxu0 0.0
    %1622 = vmatpush1.msra.mxu0 0.0
    %1623 = vmatprep.subr.mxu0 0.0
    %1624 = vmatpush1.msra.mxu0 0.0
    %1625 = vmatprep.subr.mxu0 0.0
    %1626 = vmatpush1.msra.mxu0 0.0
    %1627 = vmatprep.subr.mxu0 0.0
    %1628 = vmatpush1.msra.mxu0 0.0
    %1629 = vmatprep.subr.mxu0 0.0
    %1630 = vmatpush1.msra.mxu0 0.0
    %1631 = vmatprep.subr.mxu0 0.0
    %1632 = vmatpush1.msra.mxu0 0.0
    %1633 = vmatprep.subr.mxu0 0.0
    %1634 = vmatpush1.msra.mxu0 0.0
    %1635 = vmatprep.subr.mxu0 0.0
    %1636 = vmatpush1.msra.mxu0 0.0
    %1637 = vmatprep.subr.mxu0 0.0
    %1638 = vmatpush1.msra.mxu0 0.0
    %1639 = vmatprep.subr.mxu0 0.0
    %1640 = vmatpush1.msra.mxu0 0.0
    %1641 = vmatprep.subr.mxu0 0.0
    %1642 = vmatpush1.msra.mxu0 0.0
    %1643 = vmatprep.subr.mxu0 0.0
    %1644 = vmatpush1.msra.mxu0 0.0
    %1645 = vmatprep.subr.mxu0 0.0
    %1646 = vmatpush1.msra.mxu0 0.0
    %1647 = vmatprep.subr.mxu0 0.0
    %1648 = vmatpush1.msra.mxu0 0.0
    %1649 = vmatprep.subr.mxu0 0.0
    %1650 = vmatpush1.msra.mxu0 0.0
    %1651 = vmatprep.subr.mxu0 0.0
    %1652 = vmatpush1.msra.mxu0 0.0
    %1653 = vmatprep.subr.mxu0 0.0
    %1654 = vmatpush1.msra.mxu0 0.0
    %1655 = vmatprep.subr.mxu0 0.0
    %1656 = vmatpush1.msra.mxu0 0.0
    %1657 = vmatprep.subr.mxu0 0.0
    %1658 = vmatpush1.msra.mxu0 0.0
    %1659 = vmatprep.subr.mxu0 0.0
    %1660 = vmatpush1.msra.mxu0 0.0
    %1661 = vmatprep.subr.mxu0 0.0
    %1662 = vmatpush1.msra.mxu0 0.0
    %1663 = vmatprep.subr.mxu0 0.0
    %1664 = vmatpush1.msra.mxu0 0.0
    %1665 = vmatprep.subr.mxu0 0.0
    %1666 = vmatpush1.msra.mxu0 0.0
    %1667 = vmatprep.subr.mxu0 0.0
    %1668 = vmatpush1.msra.mxu0 0.0
    %1669 = vmatprep.subr.mxu0 0.0
    %1670 = vmatpush1.msra.mxu0 0.0
    %1671 = vmatprep.subr.mxu0 0.0
    %1672 = vmatpush1.msra.mxu0 0.0
    %1673 = vmatprep.subr.mxu0 0.0
    %1674 = vmatpush1.msra.mxu0 0.0
    %1675 = vmatprep.mubr.f32.mxu0 0.0
    %1676 = vmatmul.mubr.f32.gmra.mrb[0].mxu0 %v1609
    %v1677 = vpop.f32.mrb[0].mxu0
    %v1678 = vadd.f32 %v1605, %v1677
    %v1679 = vpop.f32.mrb[0].mxu0
    %1680 = vdwg.mxu0
    %v1681 = vsub.f32 0.0, %v1678
    %v1682 = vmul.f32 %v1681, 1.442695
    %v1683 = vpow.pop %v1682
    %v1684 = vadd.f32 %v1683, 1.0
    %v1685 = vrcp.pop %v1684
    %v1686 = vmul.f32 1.0, %v1685
    %v1687 = vtanh.pop %v1678
    %v1688 = vmul.f32 %v1686, %v1524
    %1690 = vrot.lane.b32.xlu0 %v1687, 64
    %v1691 = vpop.permute.xlu0 %1690
    %v1693 = vmul.f32 %v1686, %v1691
    %1695 = vrot.lane.b32.xlu0 %v1693, 32
    %v1696 = vpop.permute.xlu0 %1695
    %v1698 = vadd.f32 %v1688, %v1696
    %v1699 = vtanh.pop %v1698
    %1701 = vrot.lane.b32.xlu0 %v1699, 64
    %v1702 = vpop.permute.xlu0 %1701
    %v1704 = vmul.f32 %v1686, %v1702
    %v1705 = vld [vmem:[%s17] sm:$0xff]
    %v1706 = vld [vmem:[%s17 + $0x8] sm:$0xff]
    %1708 = vrot.lane.b32.xlu0 %v1704, 32
    %v1709 = vpop.permute.xlu0 %1708
    %vm1710 = vcmask 31744
    %v1712 = vsel %vm1710, %v1705, 0
    %v1715 = vsel %vm1710, %v1706, 0
    %vm1717 = vcmask 1043456
    %v1718 = vsel %vm1717, %v1709, 0
    %1720 = vmatprep.subr.mxu0 0.0
    %1721 = vmatpush1.msra.mxu0 %v1718
    %1722 = vmatprep.subr.mxu0 0.0
    %1723 = vmatpush1.msra.mxu0 0.0
    %1724 = vmatprep.subr.mxu0 0.0
    %1725 = vmatpush1.msra.mxu0 0.0
    %1726 = vmatprep.subr.mxu0 0.0
    %1727 = vmatpush1.msra.mxu0 0.0
    %1728 = vmatprep.subr.mxu0 0.0
    %1729 = vmatpush1.msra.mxu0 0.0
    %1730 = vmatprep.subr.mxu0 0.0
    %1731 = vmatpush1.msra.mxu0 0.0
    %1732 = vmatprep.subr.mxu0 0.0
    %1733 = vmatpush1.msra.mxu0 0.0
    %1734 = vmatprep.subr.mxu0 0.0
    %1735 = vmatpush1.msra.mxu0 0.0
    %1736 = vmatprep.subr.mxu0 0.0
    %1737 = vmatpush1.msra.mxu0 0.0
    %1738 = vmatprep.subr.mxu0 0.0
    %1739 = vmatpush1.msra.mxu0 0.0
    %1740 = vmatprep.subr.mxu0 0.0
    %1741 = vmatpush1.msra.mxu0 0.0
    %1742 = vmatprep.subr.mxu0 0.0
    %1743 = vmatpush1.msra.mxu0 0.0
    %1744 = vmatprep.subr.mxu0 0.0
    %1745 = vmatpush1.msra.mxu0 0.0
    %1746 = vmatprep.subr.mxu0 0.0
    %1747 = vmatpush1.msra.mxu0 0.0
    %1748 = vmatprep.subr.mxu0 0.0
    %1749 = vmatpush1.msra.mxu0 0.0
    %1750 = vmatprep.subr.mxu0 0.0
    %1751 = vmatpush1.msra.mxu0 0.0
    %1752 = vmatprep.subr.mxu0 0.0
    %1753 = vmatpush1.msra.mxu0 0.0
    %1754 = vmatprep.subr.mxu0 0.0
    %1755 = vmatpush1.msra.mxu0 0.0
    %1756 = vmatprep.subr.mxu0 0.0
    %1757 = vmatpush1.msra.mxu0 0.0
    %1758 = vmatprep.subr.mxu0 0.0
    %1759 = vmatpush1.msra.mxu0 0.0
    %1760 = vmatprep.subr.mxu0 0.0
    %1761 = vmatpush1.msra.mxu0 0.0
    %1762 = vmatprep.subr.mxu0 0.0
    %1763 = vmatpush1.msra.mxu0 0.0
    %1764 = vmatprep.subr.mxu0 0.0
    %1765 = vmatpush1.msra.mxu0 0.0
    %1766 = vmatprep.subr.mxu0 0.0
    %1767 = vmatpush1.msra.mxu0 0.0
    %1768 = vmatprep.subr.mxu0 0.0
    %1769 = vmatpush1.msra.mxu0 0.0
    %1770 = vmatprep.subr.mxu0 0.0
    %1771 = vmatpush1.msra.mxu0 0.0
    %1772 = vmatprep.subr.mxu0 0.0
    %1773 = vmatpush1.msra.mxu0 0.0
    %1774 = vmatprep.subr.mxu0 0.0
    %1775 = vmatpush1.msra.mxu0 0.0
    %1776 = vmatprep.subr.mxu0 0.0
    %1777 = vmatpush1.msra.mxu0 0.0
    %1778 = vmatprep.subr.mxu0 0.0
    %1779 = vmatpush1.msra.mxu0 0.0
    %1780 = vmatprep.subr.mxu0 0.0
    %1781 = vmatpush1.msra.mxu0 0.0
    %1782 = vmatprep.subr.mxu0 0.0
    %1783 = vmatpush1.msra.mxu0 0.0
    %1784 = vmatprep.mubr.f32.mxu0 0.0
    %1785 = vmatmul.mubr.f32.gmra.mrb[0].mxu0 %v1712
    %v1786 = vpop.f32.mrb[0].mxu0
    %v1787 = vadd.f32 0.0, %v1786
    %v1788 = vpop.f32.mrb[0].mxu0
    %1789 = vmatprep.mubr.f32.mxu0 0.0
    %1790 = vmatmul.mubr.f32.gmra.mrb[0].mxu0 %v1715
    %v1791 = vpop.f32.mrb[0].mxu0
    %v1792 = vadd.f32 0.0, %v1791
    %v1793 = vpop.f32.mrb[0].mxu0
    %1794 = vdwg.mxu0
    %v1795 = vadd.f32 %v1169, %v1787
    %v1796 = vadd.f32 %v1170, %v1792
    %v1797 = vmul.f32 %v1795, 0.33333334
    %v1798 = vmul.f32 %v1796, 0.33333334
    %1799 = vst.msk [vmem:[#allocation22] sm:$0xff] %vm410, %v1797
    %1800 = vst.msk [vmem:[#allocation22 + $0x8] sm:$0xff] %vm410, %v1798
    // Predicated region
    $region130: #{dtgl_forward.1} parent=1 // pred_check
      _
    $region131: #{dtgl_forward.1} parent=1 // pred_check_branch
      %1802 = sbr.rel (0) target = $region133
    $region132: #{dtgl_forward.1} parent=1 // pred_region
      %s1804 = ssub.s32 256, 256
      %1805 = vsyncadd [#allocation4], %s1804
      %s1806 = sshll.u32 [#allocation22], 4
      %s1807 = int_to_ptr.vmem [resolvable:$true] %s1806
      %1812 = dma.vmem_to_hbm [thread:$0]  %s1807, 256, %s20, [#allocation4], 128, 128, 8
    $region133: #{dtgl_forward.1} parent=1 // pred_fallthru
      _
    // Predicated region
    $region134: #{dtgl_forward.1} parent=1 // pred_check
      _
    $region135: #{dtgl_forward.1} parent=1 // pred_check_branch
      %1814 = sbr.rel (0) target = $region137
    $region136: #{dtgl_forward.1} parent=1 // pred_region
      %1815 = dma.done [#allocation4], 256
    $region137: #{dtgl_forward.1} parent=1 // pred_fallthru
      _
    %1816 = vsyncpa [#allocation3], 1
    %1817 = vsyncpa [#allocation6], 1
    %1818 = vsyncpa [#allocation9], 1
    %1819 = vsyncpa [#allocation12], 1
    %1820 = vsyncpa [#allocation15], 1
    %1821 = vsyncpa [#allocation18], 1
    %1822 = vsyncpa [#allocation21], 1
    %1823 = vsyncpa [#allocation4], 1

</llo_original>
